<compile_context>
chip_gen: v7x
topology: tpu7x:2x2x1
jax: 0.10.0
libtpu: 0.0.40
codegen_flags: <defaults>
</compile_context>

<pallas_src>
import functools

import jax
import jax.numpy as jnp
from jax import lax
from jax.experimental import pallas as pl
from jax.experimental.pallas import tpu as pltpu


# -----------------------------------------------------------------------------
# Kernel
# -----------------------------------------------------------------------------
def bottleneck_kernel(x_ref, xup_ref, xdn_ref,
                      w1_ref, b1_ref, w2_ref, b2_ref, w3_ref, b3_ref,
                      o_ref, h1_ref):
    """One (batch, row-tile) block of the fused bottleneck.

    x_ref  : [1, TH, W, Cin]   centre rows of the input tile (bf16)
    xup_ref: [1, 1,  W, Cin]   row just above the tile (clamped at image top)
    xdn_ref: [1, 1,  W, Cin]   row just below the tile (clamped at image bottom)
    w1_ref : [Cin,   Cmid]     conv1 (1x1) weight, BN1 scale folded in (bf16)
    w2_ref : [9*Cmid,Cmid]     conv2 (3x3) weight, tap-major (ky*3+kx), BN2 folded (bf16)
    w3_ref : [Cmid,  Cout]     conv3 (1x1) weight, BN3 scale folded in (bf16)
    b*_ref : [1, C]            folded BatchNorm biases (f32)
    o_ref  : [1, TH, W, Cout]  output tile (f32)
    h1_ref : [TH+2, W, Cmid]   f32 VMEM scratch: conv1 output incl. halo rows
    """
    _, TH, W, Cin = x_ref.shape
    Cmid = w1_ref.shape[1]
    Cout = w3_ref.shape[1]

    i = pl.program_id(1)
    is_first = i == 0
    is_last = i == pl.num_programs(1) - 1

    w1 = w1_ref[...]
    b1 = b1_ref[...]

    def conv1(rows):                               # (R, W, Cin) -> (R, W, Cmid) f32
        r = rows.shape[0]
        h = jnp.dot(rows.reshape(r * W, Cin).astype(jnp.bfloat16), w1,
                    preferred_element_type=jnp.float32)
        return jnp.maximum(h + b1, 0.0).reshape(r, W, Cmid)

    # --- conv1 (1x1) + bn1 + relu, written region-by-region into the scratch --
    # (no Cin-wide concat of the input; only the Cmid-wide conv1 result is kept)
    h1_ref[1:TH + 1] = conv1(x_ref[0])
    up = conv1(xup_ref[0])
    dn = conv1(xdn_ref[0])
    # conv2 zero-pads h1 at the true image border: kill the clamped halo rows.
    h1_ref[0:1] = jnp.where(is_first, 0.0, up)
    h1_ref[TH + 1:TH + 2] = jnp.where(is_last, 0.0, dn)

    h1 = h1_ref[...]                               # (TH+2, W, Cmid) f32

    # --- conv2 (3x3, pad=1, stride=1) as 3 accumulating K=3*Cmid matmuls ------
    # kx shifts built once with pltpu.roll (XLU) + edge masks; the only large
    # materialized buffer is the single bf16 channel-concat (3x h1, not 9x f32).
    col = lax.broadcasted_iota(jnp.int32, (1, W, 1), 1)
    h1_l = jnp.where(col == 0, 0.0, pltpu.roll(h1, shift=1, axis=1))          # h1[.., w-1]
    h1_r = jnp.where(col == W - 1, 0.0, pltpu.roll(h1, shift=W - 1, axis=1))  # h1[.., w+1]
    h1_kx = jnp.concatenate([h1_l.astype(jnp.bfloat16),
                             h1.astype(jnp.bfloat16),
                             h1_r.astype(jnp.bfloat16)], axis=-1)   # (TH+2, W, 3*Cmid)

    h2 = jnp.zeros((TH * W, Cmid), jnp.float32)
    for ky in range(3):                            # static unroll; f32 accumulation
        blk = h1_kx[ky:ky + TH].reshape(TH * W, 3 * Cmid)
        h2 = h2 + jnp.dot(blk, w2_ref[ky * 3 * Cmid:(ky + 1) * 3 * Cmid, :],
                          preferred_element_type=jnp.float32)
    h2 = jnp.maximum(h2 + b2_ref[...], 0.0)

    # --- conv3 (1x1) + bn3 + residual add + relu -------------------------------
    h3 = jnp.dot(h2.astype(jnp.bfloat16), w3_ref[...],
                 preferred_element_type=jnp.float32) + b3_ref[...]
    out = h3.reshape(TH, W, Cout) + x_ref[0].astype(jnp.float32)
    o_ref[0] = jnp.maximum(out, 0.0).astype(o_ref.dtype)


# -----------------------------------------------------------------------------
# BatchNorm folding / weight preparation (call ONCE, outside the per-step jit)
# -----------------------------------------------------------------------------
def fold_bn(gamma, beta, mean, var, eps=1e-5):
    scale = gamma / jnp.sqrt(var + eps)
    bias = beta - mean * scale
    return scale, bias


def _round_up(x, m):
    return ((x + m - 1) // m) * m


def prepare_params(params, compute_dtype=jnp.bfloat16, lane_multiple=128):
    """Fold inference BN into the conv weights, pad Cmid to a lane multiple,
    cast weights to the MXU dtype.  Padding channels are exact zeros, so the
    math is unchanged while the intermediate channel dim stays lane-dense."""
    (w1, bn1, w2, bn2, w3, bn3) = params
    s1, b1 = fold_bn(*bn1)
    s2, b2 = fold_bn(*bn2)
    s3, b3 = fold_bn(*bn3)

    cin, cmid = w1.shape
    cout = w3.shape[1]
    cpad = _round_up(cmid, lane_multiple)

    w1f = w1 * s1[None, :]                                # [Cin, Cmid]
    w2f = w2 * s2[None, None, :]                          # [9, Cmid, Cmid] (tap ky*3+kx)
    w3f = w3 * s3[None, :]                                # [Cmid, Cout]

    if cpad != cmid:
        pad = cpad - cmid
        w1f = jnp.pad(w1f, ((0, 0), (0, pad)))
        w2f = jnp.pad(w2f, ((0, 0), (0, pad), (0, pad)))
        w3f = jnp.pad(w3f, ((0, pad), (0, 0)))
        b1 = jnp.pad(b1, (0, pad))
        b2 = jnp.pad(b2, (0, pad))

    return (w1f.astype(compute_dtype),
            b1[None, :].astype(jnp.float32),
            w2f.reshape(9 * cpad, cpad).astype(compute_dtype),
            b2[None, :].astype(jnp.float32),
            w3f.astype(compute_dtype),
            b3[None, :].astype(jnp.float32))


# -----------------------------------------------------------------------------
# VMEM-aware row-tile selection
# -----------------------------------------------------------------------------
def _vmem_capacity_bytes():
    try:
        info = pltpu.get_tpu_info()
        cap = getattr(info, "vmem_capacity_bytes", None)
        if cap:
            return int(cap)
    except Exception:
        pass
    return 64 * 1024 * 1024          # conservative fallback (v7x per-core VMEM)


def _workset_bytes(th, W, Cin, Cmid, Cout, in_bytes=2, out_bytes=4):
    """Rough per-grid-step VMEM working set for row tile `th`."""
    io = 2 * ((th + 4) * W * Cin * in_bytes + th * W * Cout * out_bytes)   # 2x-buffered tiles + halos
    h1 = (th + 2) * W * Cmid * 4                  # f32 conv1 scratch
    shifts = 2 * (th + 2) * W * Cmid * 4          # rolled/masked f32 temporaries
    kx = (th + 2) * W * 3 * Cmid * 2              # bf16 kx-concat (the only big buffer)
    mids = th * W * (2 * Cmid + 2 * Cout) * 4     # h2 / h3 / epilogue temporaries
    return io + h1 + shifts + kx + mids


def _pick_row_tile(N, H, W, Cin, Cmid, Cout, vmem_limit, weight_bytes,
                   in_bytes=2, out_bytes=4, min_steps=8):
    """Largest divisor of H whose working set stays within ~1/2 of the VMEM
    left after the (default 2x-buffered) resident weights, while keeping at
    least `min_steps` grid steps for pipeline fill / v7x megacore sharding."""
    budget = max((vmem_limit - 2 * weight_bytes) // 2, 1 << 20)
    divisors = [d for d in range(1, H + 1) if H % d == 0]
    fitting = [d for d in divisors
               if _workset_bytes(d, W, Cin, Cmid, Cout, in_bytes, out_bytes) <= budget]
    if not fitting:
        fitting = [1]
    th = max(fitting)
    while N * (H // th) < min_steps:
        smaller = [d for d in fitting if d < th]
        if not smaller:
            break
        th = max(smaller)
    return th


# -----------------------------------------------------------------------------
# Wrappers
# -----------------------------------------------------------------------------
def bottleneck_pallas_nhwc(x, prepared, th_rows=None, out_dtype=jnp.float32):
    """x: [N, H, W, Cin] (any float dtype; cast to bf16 for HBM I/O).

    This NHWC entry is the production path -- no layout transposes."""
    w1f, b1, w2f, b2, w3f, b3 = prepared
    N, H, W, Cin = x.shape
    Cmid = w1f.shape[1]
    Cout = w3f.shape[1]
    assert Cin == Cout, (
        "Bottleneck with stride=1/downsample=None requires inplanes == planes*4")
    assert w2f.shape == (9 * Cmid, Cmid)

    x = x.astype(jnp.bfloat16)                   # bf16 input I/O (mem-bound regime)

    vmem_cap = _vmem_capacity_bytes()
    vmem_limit = int(vmem_cap * 3 // 4)          # 48 MiB on v7x, 96 MiB on v5e/v6e
    weight_bytes = sum(int(a.size) * a.dtype.itemsize
                       for a in (w1f, b1, w2f, b2, w3f, b3))

    TH = th_rows if th_rows is not None else _pick_row_tile(
        N, H, W, Cin, Cmid, Cout, vmem_limit, weight_bytes)
    assert H % TH == 0, "row tile must divide H"
    HT = H // TH

    in_specs = [
        # centre rows of the tile (auto-pipelined).
        pl.BlockSpec((1, TH, W, Cin), lambda n, i: (n, i, 0, 0)),
        # halo rows: single row just above / below the tile, clamped at the
        # image border (the clamped duplicate is zeroed inside the kernel).
        pl.BlockSpec((1, 1, W, Cin),
                     lambda n, i: (n, jnp.maximum(i * TH - 1, 0), 0, 0)),
        pl.BlockSpec((1, 1, W, Cin),
                     lambda n, i: (n, jnp.minimum((i + 1) * TH, H - 1), 0, 0)),
        # weights / biases: constant index map -> fetched once, resident in VMEM.
        pl.BlockSpec((Cin, Cmid), lambda n, i: (0, 0)),
        pl.BlockSpec((1, Cmid), lambda n, i: (0, 0)),
        pl.BlockSpec((9 * Cmid, Cmid), lambda n, i: (0, 0)),
        pl.BlockSpec((1, Cmid), lambda n, i: (0, 0)),
        pl.BlockSpec((Cmid, Cout), lambda n, i: (0, 0)),
        pl.BlockSpec((1, Cout), lambda n, i: (0, 0)),
    ]
    out_spec = pl.BlockSpec((1, TH, W, Cout), lambda n, i: (n, i, 0, 0))

    return pl.pallas_call(
        bottleneck_kernel,
        out_shape=jax.ShapeDtypeStruct((N, H, W, Cout), out_dtype),
        grid=(N, HT),
        in_specs=in_specs,
        out_specs=out_spec,
        scratch_shapes=[pltpu.VMEM((TH + 2, W, Cmid), jnp.float32)],
        compiler_params=pltpu.CompilerParams(
            dimension_semantics=("parallel", "parallel"),
            vmem_limit_bytes=vmem_limit,
        ),
    )(x, x, x, w1f, b1, w2f, b2, w3f, b3)


@functools.partial(jax.jit, static_argnames=("th_rows",))
def bottleneck_pallas(x_nchw, prepared, th_rows=None):
    """PyTorch-layout convenience entry point (NCHW f32 in / NCHW f32 out).

    Production code should call bottleneck_pallas_nhwc directly with NHWC
    (ideally bf16) activations to avoid the two full-tensor transposes, and
    must call prepare_params once up front (as done in __main__)."""
    x = jnp.transpose(x_nchw, (0, 2, 3, 1))          # NCHW -> NHWC
    out = bottleneck_pallas_nhwc(x, prepared, th_rows=th_rows)
    return jnp.transpose(out, (0, 3, 1, 2))          # NHWC -> NCHW


# -----------------------------------------------------------------------------
# Pure-JAX reference (same folded / bf16-rounded weights and bf16-rounded input)
# -----------------------------------------------------------------------------
def bottleneck_reference(x_nchw, params):
    w1f, b1, w2f, b2, w3f, b3 = [a.astype(jnp.float32) for a in prepare_params(params)]
    Cmid = w1f.shape[1]
    x = jnp.transpose(x_nchw, (0, 2, 3, 1))
    x = x.astype(jnp.bfloat16).astype(jnp.float32)   # match the kernel's bf16 input I/O
    dn = lax.conv_dimension_numbers(x.shape, (1, 1, 1, 1), ("NHWC", "HWIO", "NHWC"))

    h = lax.conv_general_dilated(x, w1f[None, None], (1, 1), "SAME", dimension_numbers=dn)
    h = jnp.maximum(h + b1, 0.0)
    h = lax.conv_general_dilated(h, w2f.reshape(3, 3, Cmid, Cmid), (1, 1), "SAME",
                                 dimension_numbers=dn)
    h = jnp.maximum(h + b2, 0.0)
    h = lax.conv_general_dilated(h, w3f[None, None], (1, 1), "SAME", dimension_numbers=dn)
    out = jnp.maximum(h + b3 + x, 0.0)
    return jnp.transpose(out, (0, 3, 1, 2))


# -----------------------------------------------------------------------------
# Parameters
# -----------------------------------------------------------------------------
def make_params(key, inplanes, planes):
    expansion = 4
    assert inplanes == planes * expansion, "downsample=None requires inplanes == planes*4"
    ks = jax.random.split(key, 9)

    # conv weights stored ready for NHWC matmuls ([Cin, Cout] per tap; taps ky*3+kx).
    w1 = jax.random.normal(ks[0], (inplanes, planes), jnp.float32) * 0.1
    w2 = jax.random.normal(ks[1], (9, planes, planes), jnp.float32) * 0.1
    w3 = jax.random.normal(ks[2], (planes, planes * expansion), jnp.float32) * 0.1

    def bn_params(kg, kb, km, kv, c):
        gamma = 1.0 + 0.1 * jax.random.normal(kg, (c,), jnp.float32)
        beta = 0.1 * jax.random.normal(kb, (c,), jnp.float32)
        mean = 0.1 * jax.random.normal(km, (c,), jnp.float32)
        var = jnp.abs(jax.random.normal(kv, (c,), jnp.float32)) + 0.5
        return gamma, beta, mean, var

    bn1 = bn_params(ks[3], ks[4], ks[5], ks[6], planes)
    kk = jax.random.split(ks[7], 8)
    bn2 = bn_params(kk[0], kk[1], kk[2], kk[3], planes)
    bn3 = bn_params(kk[4], kk[5], kk[6], kk[7], planes * expansion)
    return (w1, bn1, w2, bn2, w3, bn3)


if __name__ == "__main__":
    key = jax.random.PRNGKey(0)
    k_x, k_p = jax.random.split(key)

    N, planes = 2, 32
    inplanes = planes * 4                 # 128: residual requires Cin == Cout
    H = W = 16
    x = jax.random.normal(k_x, (N, inplanes, H, W), jnp.float32)   # NCHW like PyTorch
    params = make_params(k_p, inplanes, planes)

    # Fold BN / pad / cast ONCE, outside the per-call jit.
    prepared = prepare_params(params)

    # Auto row-tile: keeps >= 8 grid steps here (TH=4 -> grid (2, 4)), which
    # also exercises the halo / tile-seam path.
    out = bottleneck_pallas(x, prepared)
    out = jax.block_until_ready(out)

    ref = bottleneck_reference(x, params)
    assert out.shape == (N, inplanes, H, W)
    # bf16 matmuls + bf16 input I/O vs f32 reference -> loose tolerance.
    assert jnp.allclose(out, ref, atol=5e-2, rtol=5e-2), (
        "mismatch vs JAX reference, max abs diff "
        f"{float(jnp.max(jnp.abs(out - ref))):.4f}")

    print("KERNEL_OK")
</pallas_src>

<mosaic_0001>
module attributes {stable_mosaic.version = 11 : i64} {
  func.func @bottleneck_kernel(%arg0: i32, %arg1: i32, %arg2: memref<1x4x16x128xbf16, #tpu.memory_space<vmem>>, %arg3: memref<1x1x16x128xbf16, #tpu.memory_space<vmem>>, %arg4: memref<1x1x16x128xbf16, #tpu.memory_space<vmem>>, %arg5: memref<128x128xbf16, #tpu.memory_space<vmem>>, %arg6: memref<1x128xf32, #tpu.memory_space<vmem>>, %arg7: memref<1152x128xbf16, #tpu.memory_space<vmem>>, %arg8: memref<1x128xf32, #tpu.memory_space<vmem>>, %arg9: memref<128x128xbf16, #tpu.memory_space<vmem>>, %arg10: memref<1x128xf32, #tpu.memory_space<vmem>>, %arg11: memref<1x4x16x128xf32, #tpu.memory_space<vmem>>, %arg12: memref<6x16x128xf32, #tpu.memory_space<vmem>>) attributes {dimension_semantics = [#tpu.dimension_semantics<parallel>, #tpu.dimension_semantics<parallel>], iteration_bounds = array<i64: 2, 4>, scalar_prefetch = 0 : i64, scratch_operands = 1 : i64, tpu.core_type = #tpu.core_type<tc>, window_params = [{transform_indices = @transform_0, window_bounds = array<i64: 1, 4, 16, 128>}, {transform_indices = @transform_1, window_bounds = array<i64: 1, 1, 16, 128>}, {transform_indices = @transform_2, window_bounds = array<i64: 1, 1, 16, 128>}, {pipeline_mode = #tpu.pipeline_mode<synchronous>, transform_indices = @transform_3, window_bounds = array<i64: 128, 128>}, {pipeline_mode = #tpu.pipeline_mode<synchronous>, transform_indices = @transform_4, window_bounds = array<i64: 1, 128>}, {pipeline_mode = #tpu.pipeline_mode<synchronous>, transform_indices = @transform_5, window_bounds = array<i64: 1152, 128>}, {pipeline_mode = #tpu.pipeline_mode<synchronous>, transform_indices = @transform_6, window_bounds = array<i64: 1, 128>}, {pipeline_mode = #tpu.pipeline_mode<synchronous>, transform_indices = @transform_7, window_bounds = array<i64: 128, 128>}, {pipeline_mode = #tpu.pipeline_mode<synchronous>, transform_indices = @transform_8, window_bounds = array<i64: 1, 128>}, {transform_indices = @transform_9, window_bounds = array<i64: 1, 4, 16, 128>}]} {
    %c0_i32 = arith.constant 0 : i32
    %0 = arith.cmpi eq, %arg1, %c0_i32 : i32
    %c3_i32 = arith.constant 3 : i32
    %1 = arith.cmpi eq, %arg1, %c3_i32 : i32
    %c0 = arith.constant 0 : index
    %c0_0 = arith.constant 0 : index
    %2 = vector.load %arg5[%c0, %c0_0] : memref<128x128xbf16, #tpu.memory_space<vmem>>, vector<128x128xbf16>
    %c0_1 = arith.constant 0 : index
    %c0_2 = arith.constant 0 : index
    %3 = vector.load %arg6[%c0_1, %c0_2] : memref<1x128xf32, #tpu.memory_space<vmem>>, vector<1x128xf32>
    %c0_3 = arith.constant 0 : index
    %c0_4 = arith.constant 0 : index
    %c0_5 = arith.constant 0 : index
    %c0_6 = arith.constant 0 : index
    %4 = vector.load %arg2[%c0_3, %c0_4, %c0_5, %c0_6] : memref<1x4x16x128xbf16, #tpu.memory_space<vmem>>, vector<1x4x16x128xbf16>
    %5 = vector.shape_cast %4 : vector<1x4x16x128xbf16> to vector<4x16x128xbf16>
    %6 = vector.shape_cast %5 : vector<4x16x128xbf16> to vector<64x128xbf16>
    %cst = arith.constant dense<0.000000e+00> : vector<64x128xf32>
    %7 = tpu.matmul %6, %2, %cst {dimension_numbers = #tpu.dot_dimension_numbers<[1], [0], [0], [1], [0, 0, 1, 1], [], []>} : vector<64x128xbf16>, vector<128x128xbf16>, vector<64x128xf32> -> vector<64x128xf32>
    %8 = vector.broadcast %3 : vector<1x128xf32> to vector<64x128xf32>
    %9 = arith.addf %7, %8 : vector<64x128xf32>
    %cst_7 = arith.constant 0.000000e+00 : f32
    %10 = vector.broadcast %cst_7 : f32 to vector<64x128xf32>
    %11 = arith.maximumf %9, %10 : vector<64x128xf32>
    %12 = vector.shape_cast %11 : vector<64x128xf32> to vector<4x16x128xf32>
    %c1 = arith.constant 1 : index
    %c0_8 = arith.constant 0 : index
    %c0_9 = arith.constant 0 : index
    %13 = vector.load %arg12[%c1, %c0_8, %c0_9] : memref<6x16x128xf32, #tpu.memory_space<vmem>>, vector<4x16x128xf32>
    tpu.vector_store %arg12[%c1, %c0_8, %c0_9], %12 {strides = array<i32>} : memref<6x16x128xf32, #tpu.memory_space<vmem>>, vector<4x16x128xf32>,
    %c0_10 = arith.constant 0 : index
    %c0_11 = arith.constant 0 : index
    %c0_12 = arith.constant 0 : index
    %c0_13 = arith.constant 0 : index
    %14 = vector.load %arg3[%c0_10, %c0_11, %c0_12, %c0_13] : memref<1x1x16x128xbf16, #tpu.memory_space<vmem>>, vector<1x1x16x128xbf16>
    %15 = vector.shape_cast %14 : vector<1x1x16x128xbf16> to vector<1x16x128xbf16>
    %16 = vector.shape_cast %15 : vector<1x16x128xbf16> to vector<16x128xbf16>
    %cst_14 = arith.constant dense<0.000000e+00> : vector<16x128xf32>
    %17 = tpu.matmul %16, %2, %cst_14 {dimension_numbers = #tpu.dot_dimension_numbers<[1], [0], [0], [1], [0, 0, 1, 1], [], []>} : vector<16x128xbf16>, vector<128x128xbf16>, vector<16x128xf32> -> vector<16x128xf32>
    %18 = vector.broadcast %3 : vector<1x128xf32> to vector<16x128xf32>
    %19 = arith.addf %17, %18 : vector<16x128xf32>
    %cst_15 = arith.constant 0.000000e+00 : f32
    %20 = vector.broadcast %cst_15 : f32 to vector<16x128xf32>
    %21 = arith.maximumf %19, %20 : vector<16x128xf32>
    %22 = vector.shape_cast %21 : vector<16x128xf32> to vector<1x16x128xf32>
    %c0_16 = arith.constant 0 : index
    %c0_17 = arith.constant 0 : index
    %c0_18 = arith.constant 0 : index
    %c0_19 = arith.constant 0 : index
    %23 = vector.load %arg4[%c0_16, %c0_17, %c0_18, %c0_19] : memref<1x1x16x128xbf16, #tpu.memory_space<vmem>>, vector<1x1x16x128xbf16>
    %24 = vector.shape_cast %23 : vector<1x1x16x128xbf16> to vector<1x16x128xbf16>
    %25 = vector.shape_cast %24 : vector<1x16x128xbf16> to vector<16x128xbf16>
    %cst_20 = arith.constant dense<0.000000e+00> : vector<16x128xf32>
    %26 = tpu.matmul %25, %2, %cst_20 {dimension_numbers = #tpu.dot_dimension_numbers<[1], [0], [0], [1], [0, 0, 1, 1], [], []>} : vector<16x128xbf16>, vector<128x128xbf16>, vector<16x128xf32> -> vector<16x128xf32>
    %27 = vector.broadcast %3 : vector<1x128xf32> to vector<16x128xf32>
    %28 = arith.addf %26, %27 : vector<16x128xf32>
    %cst_21 = arith.constant 0.000000e+00 : f32
    %29 = vector.broadcast %cst_21 : f32 to vector<16x128xf32>
    %30 = arith.maximumf %28, %29 : vector<16x128xf32>
    %31 = vector.shape_cast %30 : vector<16x128xf32> to vector<1x16x128xf32>
    %cst_22 = arith.constant 0.000000e+00 : f32
    %32 = vector.broadcast %cst_22 : f32 to vector<1x16x128xf32>
    %33 = arith.select %0, %32, %22 : vector<1x16x128xf32>
    %c0_23 = arith.constant 0 : index
    %c0_24 = arith.constant 0 : index
    %c0_25 = arith.constant 0 : index
    %34 = vector.load %arg12[%c0_23, %c0_24, %c0_25] : memref<6x16x128xf32, #tpu.memory_space<vmem>>, vector<1x16x128xf32>
    tpu.vector_store %arg12[%c0_23, %c0_24, %c0_25], %33 {strides = array<i32>} : memref<6x16x128xf32, #tpu.memory_space<vmem>>, vector<1x16x128xf32>,
    %cst_26 = arith.constant 0.000000e+00 : f32
    %35 = vector.broadcast %cst_26 : f32 to vector<1x16x128xf32>
    %36 = arith.select %1, %35, %31 : vector<1x16x128xf32>
    %c5 = arith.constant 5 : index
    %c0_27 = arith.constant 0 : index
    %c0_28 = arith.constant 0 : index
    %37 = vector.load %arg12[%c5, %c0_27, %c0_28] : memref<6x16x128xf32, #tpu.memory_space<vmem>>, vector<1x16x128xf32>
    tpu.vector_store %arg12[%c5, %c0_27, %c0_28], %36 {strides = array<i32>} : memref<6x16x128xf32, #tpu.memory_space<vmem>>, vector<1x16x128xf32>,
    %c0_29 = arith.constant 0 : index
    %c0_30 = arith.constant 0 : index
    %c0_31 = arith.constant 0 : index
    %38 = vector.load %arg12[%c0_29, %c0_30, %c0_31] : memref<6x16x128xf32, #tpu.memory_space<vmem>>, vector<6x16x128xf32>
    %39 = tpu.iota {dimensions = array<i32: 1>} : vector<1x16x1xi32>
    %c0_i32_32 = arith.constant 0 : i32
    %40 = vector.broadcast %c0_i32_32 : i32 to vector<1x16x1xi32>
    %41 = arith.cmpi eq, %39, %40 : vector<1x16x1xi32>
    %c1_i32 = arith.constant 1 : i32
    %42 = tpu.dynamic_rotate %38 by %c1_i32 dim 1 : vector<6x16x128xf32>, i32 -> vector<6x16x128xf32>
    %cst_33 = arith.constant 0.000000e+00 : f32
    %43 = vector.shape_cast %41 : vector<1x16x1xi1> to vector<1x16x1xi1>
    %44 = vector.broadcast %43 : vector<1x16x1xi1> to vector<6x16x128xi1>
    %45 = vector.broadcast %cst_33 : f32 to vector<6x16x128xf32>
    %46 = arith.select %44, %45, %42 : vector<6x16x128xi1>, vector<6x16x128xf32>
    %c15_i32 = arith.constant 15 : i32
    %47 = vector.broadcast %c15_i32 : i32 to vector<1x16x1xi32>
    %48 = arith.cmpi eq, %39, %47 : vector<1x16x1xi32>
    %c15_i32_34 = arith.constant 15 : i32
    %49 = tpu.dynamic_rotate %38 by %c15_i32_34 dim 1 : vector<6x16x128xf32>, i32 -> vector<6x16x128xf32>
    %cst_35 = arith.constant 0.000000e+00 : f32
    %50 = vector.shape_cast %48 : vector<1x16x1xi1> to vector<1x16x1xi1>
    %51 = vector.broadcast %50 : vector<1x16x1xi1> to vector<6x16x128xi1>
    %52 = vector.broadcast %cst_35 : f32 to vector<6x16x128xf32>
    %53 = arith.select %51, %52, %49 : vector<6x16x128xi1>, vector<6x16x128xf32>
    %54 = arith.truncf %46 : vector<6x16x128xf32> to vector<6x16x128xbf16>
    %55 = arith.truncf %38 : vector<6x16x128xf32> to vector<6x16x128xbf16>
    %56 = arith.truncf %53 : vector<6x16x128xf32> to vector<6x16x128xbf16>
    %57 = tpu.concatenate %54, %55, %56 in 2 : vector<6x16x128xbf16>, vector<6x16x128xbf16>, vector<6x16x128xbf16> -> vector<6x16x384xbf16>
    %cst_36 = arith.constant 0.000000e+00 : f32
    %58 = vector.broadcast %cst_36 : f32 to vector<64x128xf32>
    %59 = vector.extract_strided_slice %57 {offsets = [0, 0, 0], sizes = [4, 16, 384], strides = [1, 1, 1]} : vector<6x16x384xbf16> to vector<4x16x384xbf16>
    %60 = vector.shape_cast %59 : vector<4x16x384xbf16> to vector<64x384xbf16>
    %c0_37 = arith.constant 0 : index
    %c0_38 = arith.constant 0 : index
    %61 = vector.load %arg7[%c0_37, %c0_38] : memref<1152x128xbf16, #tpu.memory_space<vmem>>, vector<384x128xbf16>
    %cst_39 = arith.constant dense<0.000000e+00> : vector<64x128xf32>
    %62 = tpu.matmul %60, %61, %cst_39 {dimension_numbers = #tpu.dot_dimension_numbers<[1], [0], [0], [1], [0, 0, 1, 1], [], []>} : vector<64x384xbf16>, vector<384x128xbf16>, vector<64x128xf32> -> vector<64x128xf32>
    %63 = arith.addf %58, %62 : vector<64x128xf32>
    %64 = vector.extract_strided_slice %57 {offsets = [1, 0, 0], sizes = [4, 16, 384], strides = [1, 1, 1]} : vector<6x16x384xbf16> to vector<4x16x384xbf16>
    %65 = vector.shape_cast %64 : vector<4x16x384xbf16> to vector<64x384xbf16>
    %c384 = arith.constant 384 : index
    %c0_40 = arith.constant 0 : index
    %66 = vector.load %arg7[%c384, %c0_40] : memref<1152x128xbf16, #tpu.memory_space<vmem>>, vector<384x128xbf16>
    %cst_41 = arith.constant dense<0.000000e+00> : vector<64x128xf32>
    %67 = tpu.matmul %65, %66, %cst_41 {dimension_numbers = #tpu.dot_dimension_numbers<[1], [0], [0], [1], [0, 0, 1, 1], [], []>} : vector<64x384xbf16>, vector<384x128xbf16>, vector<64x128xf32> -> vector<64x128xf32>
    %68 = arith.addf %63, %67 : vector<64x128xf32>
    %69 = vector.extract_strided_slice %57 {offsets = [2, 0, 0], sizes = [4, 16, 384], strides = [1, 1, 1]} : vector<6x16x384xbf16> to vector<4x16x384xbf16>
    %70 = vector.shape_cast %69 : vector<4x16x384xbf16> to vector<64x384xbf16>
    %c768 = arith.constant 768 : index
    %c0_42 = arith.constant 0 : index
    %71 = vector.load %arg7[%c768, %c0_42] : memref<1152x128xbf16, #tpu.memory_space<vmem>>, vector<384x128xbf16>
    %cst_43 = arith.constant dense<0.000000e+00> : vector<64x128xf32>
    %72 = tpu.matmul %70, %71, %cst_43 {dimension_numbers = #tpu.dot_dimension_numbers<[1], [0], [0], [1], [0, 0, 1, 1], [], []>} : vector<64x384xbf16>, vector<384x128xbf16>, vector<64x128xf32> -> vector<64x128xf32>
    %73 = arith.addf %68, %72 : vector<64x128xf32>
    %c0_44 = arith.constant 0 : index
    %c0_45 = arith.constant 0 : index
    %74 = vector.load %arg8[%c0_44, %c0_45] : memref<1x128xf32, #tpu.memory_space<vmem>>, vector<1x128xf32>
    %75 = vector.broadcast %74 : vector<1x128xf32> to vector<64x128xf32>
    %76 = arith.addf %73, %75 : vector<64x128xf32>
    %cst_46 = arith.constant 0.000000e+00 : f32
    %77 = vector.broadcast %cst_46 : f32 to vector<64x128xf32>
    %78 = arith.maximumf %76, %77 : vector<64x128xf32>
    %79 = arith.truncf %78 : vector<64x128xf32> to vector<64x128xbf16>
    %c0_47 = arith.constant 0 : index
    %c0_48 = arith.constant 0 : index
    %80 = vector.load %arg9[%c0_47, %c0_48] : memref<128x128xbf16, #tpu.memory_space<vmem>>, vector<128x128xbf16>
    %cst_49 = arith.constant dense<0.000000e+00> : vector<64x128xf32>
    %81 = tpu.matmul %79, %80, %cst_49 {dimension_numbers = #tpu.dot_dimension_numbers<[1], [0], [0], [1], [0, 0, 1, 1], [], []>} : vector<64x128xbf16>, vector<128x128xbf16>, vector<64x128xf32> -> vector<64x128xf32>
    %c0_50 = arith.constant 0 : index
    %c0_51 = arith.constant 0 : index
    %82 = vector.load %arg10[%c0_50, %c0_51] : memref<1x128xf32, #tpu.memory_space<vmem>>, vector<1x128xf32>
    %83 = vector.broadcast %82 : vector<1x128xf32> to vector<64x128xf32>
    %84 = arith.addf %81, %83 : vector<64x128xf32>
    %85 = vector.shape_cast %84 : vector<64x128xf32> to vector<4x16x128xf32>
    %c0_52 = arith.constant 0 : index
    %c0_53 = arith.constant 0 : index
    %c0_54 = arith.constant 0 : index
    %c0_55 = arith.constant 0 : index
    %86 = vector.load %arg2[%c0_52, %c0_53, %c0_54, %c0_55] : memref<1x4x16x128xbf16, #tpu.memory_space<vmem>>, vector<1x4x16x128xbf16>
    %87 = vector.shape_cast %86 : vector<1x4x16x128xbf16> to vector<4x16x128xbf16>
    %88 = arith.extf %87 : vector<4x16x128xbf16> to vector<4x16x128xf32>
    %89 = arith.addf %85, %88 : vector<4x16x128xf32>
    %cst_56 = arith.constant 0.000000e+00 : f32
    %90 = vector.broadcast %cst_56 : f32 to vector<4x16x128xf32>
    %91 = arith.maximumf %89, %90 : vector<4x16x128xf32>
    %c0_57 = arith.constant 0 : index
    %c0_58 = arith.constant 0 : index
    %c0_59 = arith.constant 0 : index
    %c0_60 = arith.constant 0 : index
    %92 = vector.load %arg11[%c0_57, %c0_58, %c0_59, %c0_60] : memref<1x4x16x128xf32, #tpu.memory_space<vmem>>, vector<1x4x16x128xf32>
    %93 = vector.shape_cast %92 : vector<1x4x16x128xf32> to vector<4x16x128xf32>
    %94 = vector.shape_cast %91 : vector<4x16x128xf32> to vector<1x4x16x128xf32>
    tpu.vector_store %arg11[%c0_57, %c0_58, %c0_59, %c0_60], %94 {strides = array<i32>} : memref<1x4x16x128xf32, #tpu.memory_space<vmem>>, vector<1x4x16x128xf32>,
    return
  }
  func.func @transform_0(%arg0: i32, %arg1: i32) -> (i32, i32, i32, i32) {
    %c0_i32 = arith.constant 0 : i32
    %c0_i32_0 = arith.constant 0 : i32
    %c0_i32_1 = arith.constant 0 : i32
    return %arg0, %arg1, %c0_i32, %c0_i32_0 : i32, i32, i32, i32
  }
  func.func @transform_1(%arg0: i32, %arg1: i32) -> (i32, i32, i32, i32) {
    %c4_i32 = arith.constant 4 : i32
    %0 = arith.muli %arg1, %c4_i32 : i32
    %c1_i32 = arith.constant 1 : i32
    %1 = arith.subi %0, %c1_i32 : i32
    %c0_i32 = arith.constant 0 : i32
    %2 = arith.maxsi %1, %c0_i32 : i32
    %c0_i32_0 = arith.constant 0 : i32
    %c0_i32_1 = arith.constant 0 : i32
    %c0_i32_2 = arith.constant 0 : i32
    return %arg0, %2, %c0_i32_0, %c0_i32_1 : i32, i32, i32, i32
  }
  func.func @transform_2(%arg0: i32, %arg1: i32) -> (i32, i32, i32, i32) {
    %c1_i32 = arith.constant 1 : i32
    %0 = arith.addi %arg1, %c1_i32 : i32
    %c4_i32 = arith.constant 4 : i32
    %1 = arith.muli %0, %c4_i32 : i32
    %c15_i32 = arith.constant 15 : i32
    %2 = arith.minsi %1, %c15_i32 : i32
    %c0_i32 = arith.constant 0 : i32
    %c0_i32_0 = arith.constant 0 : i32
    %c0_i32_1 = arith.constant 0 : i32
    return %arg0, %2, %c0_i32, %c0_i32_0 : i32, i32, i32, i32
  }
  func.func @transform_3(%arg0: i32, %arg1: i32) -> (i32, i32) {
    %c0_i32 = arith.constant 0 : i32
    %c0_i32_0 = arith.constant 0 : i32
    %c0_i32_1 = arith.constant 0 : i32
    return %c0_i32, %c0_i32_0 : i32, i32
  }
  func.func @transform_4(%arg0: i32, %arg1: i32) -> (i32, i32) {
    %c0_i32 = arith.constant 0 : i32
    %c0_i32_0 = arith.constant 0 : i32
    %c0_i32_1 = arith.constant 0 : i32
    return %c0_i32, %c0_i32_0 : i32, i32
  }
  func.func @transform_5(%arg0: i32, %arg1: i32) -> (i32, i32) {
    %c0_i32 = arith.constant 0 : i32
    %c0_i32_0 = arith.constant 0 : i32
    %c0_i32_1 = arith.constant 0 : i32
    return %c0_i32, %c0_i32_0 : i32, i32
  }
  func.func @transform_6(%arg0: i32, %arg1: i32) -> (i32, i32) {
    %c0_i32 = arith.constant 0 : i32
    %c0_i32_0 = arith.constant 0 : i32
    %c0_i32_1 = arith.constant 0 : i32
    return %c0_i32, %c0_i32_0 : i32, i32
  }
  func.func @transform_7(%arg0: i32, %arg1: i32) -> (i32, i32) {
    %c0_i32 = arith.constant 0 : i32
    %c0_i32_0 = arith.constant 0 : i32
    %c0_i32_1 = arith.constant 0 : i32
    return %c0_i32, %c0_i32_0 : i32, i32
  }
  func.func @transform_8(%arg0: i32, %arg1: i32) -> (i32, i32) {
    %c0_i32 = arith.constant 0 : i32
    %c0_i32_0 = arith.constant 0 : i32
    %c0_i32_1 = arith.constant 0 : i32
    return %c0_i32, %c0_i32_0 : i32, i32
  }
  func.func @transform_9(%arg0: i32, %arg1: i32) -> (i32, i32, i32, i32) {
    %c0_i32 = arith.constant 0 : i32
    %c0_i32_0 = arith.constant 0 : i32
    %c0_i32_1 = arith.constant 0 : i32
    return %arg0, %arg1, %c0_i32, %c0_i32_0 : i32, i32, i32, i32
  }
}

</mosaic_0001>

<llo_original>
// kernel: bottleneck_pallas.1
$region0: #{bottleneck_pallas.1}
  #allocation0 [shape = 'u32[]', space=smem, size = 0x4, offset = 0x4, fixed_abs, tag = 'smem constant byte address 0x4 - core index']
  #allocation1 [shape = 'u32[144,128]{1,0:T(1,128)}', space=vmem, size = 0x12000, scoped, tag = 'internal scratch']
  #allocation2 [shape = 'f32[6,16,128]{2,1,0:T(8,128)}', space=vmem, size = 0xc000, scoped, tag = 'scratch operand']
  %s0 = inlined_call_operand.vmem [shape: bf16[2,16,16,128], index: 0, kind: input, shape index: {}, may-alias: {0,1,2}]
  %s1 = inlined_call_operand.vmem [shape: bf16[2,16,16,128], index: 1, kind: input, shape index: {}, may-alias: {0,1,2}]
  %s2 = inlined_call_operand.vmem [shape: bf16[2,16,16,128], index: 2, kind: input, shape index: {}, may-alias: {0,1,2}]
  %s3 = inlined_call_operand.vmem [shape: bf16[128,128], index: 3, kind: input, shape index: {}]
  %s4 = inlined_call_operand.vmem [shape: f32[1,128], index: 4, kind: input, shape index: {}]
  %s5 = inlined_call_operand.vmem [shape: bf16[1152,128], index: 5, kind: input, shape index: {}]
  %s6 = inlined_call_operand.vmem [shape: f32[1,128], index: 6, kind: input, shape index: {}]
  %s7 = inlined_call_operand.vmem [shape: bf16[128,128], index: 7, kind: input, shape index: {}]
  %s8 = inlined_call_operand.vmem [shape: f32[1,128], index: 8, kind: input, shape index: {}]
  %s9 = inlined_call_operand.hbm [shape: f32[2,16,16,128], index: 9, kind: output, shape index: {}]
  %s10 = sld [smem:[#allocation0]]
  $region69: #{bottleneck_pallas.1} parent=0
    _
  %s12 = ssub.s32 1, %s10
  %s13 = scalar_select 0, %s12, %s10
  $region1: #{bottleneck_pallas.1} parent=0
    #allocation3 [shape = 'u8[65536]{0}', space=vmem, size = 0x10000, scoped, tag = 'output window, operand 0']
    #allocation4 [shape = 's32[2]{0}', space=sflag, size = 0x8, scoped, tag = 'scoped memory for bottleneck_pallas.1']
    %14 = vsyncpa [#allocation4], 0
    %s15 = scalar_lea.sflag [#allocation4], 1
    %16 = vsyncpa %s15, 0
    loop: start=0, step=1, limit=10
    $region2: #{bottleneck_pallas.1} parent=1 // loop_pre_header
      _
    $region3: #{bottleneck_pallas.1} parent=1 // loop_header
      %s18 = sphi 0, %s22
      %p19 = scmp.ge.s32.totalorder %s18, 10
      %s25 = sphi 0, %s37
      %s26 = sphi 0, %s33
      %s27 = sphi 0, %s25
      %s28 = sphi 0, %s26
      %s29 = sphi 0, %s27
      %s30 = sphi 0, %s28
      %s42 = sphi 0, %s44
      %s45 = sphi 0, %s42
      %s46 = sphi 0, %s45
      %s62 = sphi 0, %s46
      %s78 = sphi 0, %s80
      %s81 = sphi 0, %s78
      %s82 = sphi 0, %s81
      %s98 = sphi 0, %s82
      %s114 = sphi 0, %s116
      %s117 = sphi 0, %s114
      %s118 = sphi 0, %s117
      %s134 = sphi 0, %s118
      %s138 = sphi 0, %s138
      %s140 = sphi 0, %s138
      %s141 = sphi 0, %s140
      %s155 = sphi 0, %s141
      %s159 = sphi 0, %s159
      %s161 = sphi 0, %s159
      %s162 = sphi 0, %s161
      %s176 = sphi 0, %s162
      %s180 = sphi 0, %s180
      %s182 = sphi 0, %s180
      %s183 = sphi 0, %s182
      %s197 = sphi 0, %s183
      %s201 = sphi 0, %s201
      %s203 = sphi 0, %s201
      %s204 = sphi 0, %s203
      %s218 = sphi 0, %s204
      %s222 = sphi 0, %s222
      %s224 = sphi 0, %s222
      %s225 = sphi 0, %s224
      %s239 = sphi 0, %s225
      %s243 = sphi 0, %s243
      %s245 = sphi 0, %s243
      %s246 = sphi 0, %s245
      %s260 = sphi 0, %s246
      %s268 = sphi 0, %s270
      %s271 = sphi 0, %s268
      %s272 = sphi 0, %s271
      %s288 = sphi 0, %s272
    $region4: #{bottleneck_pallas.1} parent=1 // loop_header_branch
      %21 = sbr.rel (%p19) target = $region8
    $region5: #{bottleneck_pallas.1} parent=1 // loop_body
      %s23 = ssub.s32 %s18, 1
      %s24 = ssub.s32 %s18, 2
      %s31 = sadd.s32 1, %s26
      %p32 = scmp.ge.s32.totalorder %s31, 4
      %s33 = scalar_select %p32, 0, %s31
      %s34 = sadd.s32 1, %s25
      %s35 = scalar_select %p32, %s34, %s25
      %p36 = scmp.ge.s32.totalorder %s35, 2
      %s37 = scalar_select %p36, 0, %s35
      %s38 = ssub.s32 %s25, %s37
      %s39 = ssub.s32 %s26, %s33
      %s40 = sor.u32 %s38, %s39
      %p41 = scmp.eq.s32.totalorder %s40, 0
      %s43 = sadd.s32 %s42, 1
      %s44 = scalar_select %p41, %s42, %s43
      %p47 = pneg %p41
      %p48 = scmp.eq.s32.totalorder %s18, 7
      %p49 = por %p47, %p48
      %p50 = scmp.ne.s32.totalorder %s42, %s45
      %p51 = scmp.eq.s32.totalorder %s18, 0
      %p52 = por %p50, %p51
      %p53 = scmp.ne.s32.totalorder %s42, %s45
      %p54 = scmp.eq.s32.totalorder %s23, 7
      %p55 = por %p53, %p54
      %p56 = scmp.ne.s32.totalorder %s45, %s46
      %p57 = scmp.eq.s32.totalorder %s23, 0
      %p58 = por %p56, %p57
      %p59 = scmp.ne.s32.totalorder %s45, %s46
      %p60 = scmp.eq.s32.totalorder %s24, 7
      %p61 = por %p59, %p60
      %p63 = scmp.ne.s32.totalorder %s46, %s62
      %p64 = scmp.eq.s32.totalorder %s24, 0
      %p65 = por %p63, %p64
      %s66 = smul.u32 %s26, 4
      %s67 = ssub.s32 %s66, 1
      %p68 = scmp.gt.s32.totalorder %s67, 0
      %s69 = scalar_select %p68, %s67, 0
      %s70 = smul.u32 %s33, 4
      %s71 = ssub.s32 %s70, 1
      %p72 = scmp.gt.s32.totalorder %s71, 0
      %s73 = scalar_select %p72, %s71, 0
      %s74 = ssub.s32 %s25, %s37
      %s75 = ssub.s32 %s69, %s73
      %s76 = sor.u32 %s74, %s75
      %p77 = scmp.eq.s32.totalorder %s76, 0
      %s79 = sadd.s32 %s78, 1
      %s80 = scalar_select %p77, %s78, %s79
      %p83 = pneg %p77
      %p84 = scmp.eq.s32.totalorder %s18, 7
      %p85 = por %p83, %p84
      %p86 = scmp.ne.s32.totalorder %s78, %s81
      %p87 = scmp.eq.s32.totalorder %s18, 0
      %p88 = por %p86, %p87
      %p89 = scmp.ne.s32.totalorder %s78, %s81
      %p90 = scmp.eq.s32.totalorder %s23, 7
      %p91 = por %p89, %p90
      %p92 = scmp.ne.s32.totalorder %s81, %s82
      %p93 = scmp.eq.s32.totalorder %s23, 0
      %p94 = por %p92, %p93
      %p95 = scmp.ne.s32.totalorder %s81, %s82
      %p96 = scmp.eq.s32.totalorder %s24, 7
      %p97 = por %p95, %p96
      %p99 = scmp.ne.s32.totalorder %s82, %s98
      %p100 = scmp.eq.s32.totalorder %s24, 0
      %p101 = por %p99, %p100
      %s102 = sadd.s32 %s26, 1
      %s103 = smul.u32 %s102, 4
      %p104 = scmp.lt.s32.totalorder %s103, 15
      %s105 = scalar_select %p104, %s103, 15
      %s106 = sadd.s32 %s33, 1
      %s107 = smul.u32 %s106, 4
      %p108 = scmp.lt.s32.totalorder %s107, 15
      %s109 = scalar_select %p108, %s107, 15
      %s110 = ssub.s32 %s25, %s37
      %s111 = ssub.s32 %s105, %s109
      %s112 = sor.u32 %s110, %s111
      %p113 = scmp.eq.s32.totalorder %s112, 0
      %s115 = sadd.s32 %s114, 1
      %s116 = scalar_select %p113, %s114, %s115
      %p119 = pneg %p113
      %p120 = scmp.eq.s32.totalorder %s18, 7
      %p121 = por %p119, %p120
      %p122 = scmp.ne.s32.totalorder %s114, %s117
      %p123 = scmp.eq.s32.totalorder %s18, 0
      %p124 = por %p122, %p123
      %p125 = scmp.ne.s32.totalorder %s114, %s117
      %p126 = scmp.eq.s32.totalorder %s23, 7
      %p127 = por %p125, %p126
      %p128 = scmp.ne.s32.totalorder %s117, %s118
      %p129 = scmp.eq.s32.totalorder %s23, 0
      %p130 = por %p128, %p129
      %p131 = scmp.ne.s32.totalorder %s117, %s118
      %p132 = scmp.eq.s32.totalorder %s24, 7
      %p133 = por %p131, %p132
      %p135 = scmp.ne.s32.totalorder %s118, %s134
      %p136 = scmp.eq.s32.totalorder %s24, 0
      %p137 = por %p135, %p136
      %s139 = sadd.s32 %s138, 1
      %p142 = scmp.eq.s32.totalorder %s18, 7
      %p143 = scmp.ne.s32.totalorder %s138, %s140
      %p144 = scmp.eq.s32.totalorder %s18, 0
      %p145 = por %p143, %p144
      %p146 = scmp.ne.s32.totalorder %s138, %s140
      %p147 = scmp.eq.s32.totalorder %s23, 7
      %p148 = por %p146, %p147
      %p149 = scmp.ne.s32.totalorder %s140, %s141
      %p150 = scmp.eq.s32.totalorder %s23, 0
      %p151 = por %p149, %p150
      %p152 = scmp.ne.s32.totalorder %s140, %s141
      %p153 = scmp.eq.s32.totalorder %s24, 7
      %p154 = por %p152, %p153
      %p156 = scmp.ne.s32.totalorder %s141, %s155
      %p157 = scmp.eq.s32.totalorder %s24, 0
      %p158 = por %p156, %p157
      %s160 = sadd.s32 %s159, 1
      %p163 = scmp.eq.s32.totalorder %s18, 7
      %p164 = scmp.ne.s32.totalorder %s159, %s161
      %p165 = scmp.eq.s32.totalorder %s18, 0
      %p166 = por %p164, %p165
      %p167 = scmp.ne.s32.totalorder %s159, %s161
      %p168 = scmp.eq.s32.totalorder %s23, 7
      %p169 = por %p167, %p168
      %p170 = scmp.ne.s32.totalorder %s161, %s162
      %p171 = scmp.eq.s32.totalorder %s23, 0
      %p172 = por %p170, %p171
      %p173 = scmp.ne.s32.totalorder %s161, %s162
      %p174 = scmp.eq.s32.totalorder %s24, 7
      %p175 = por %p173, %p174
      %p177 = scmp.ne.s32.totalorder %s162, %s176
      %p178 = scmp.eq.s32.totalorder %s24, 0
      %p179 = por %p177, %p178
      %s181 = sadd.s32 %s180, 1
      %p184 = scmp.eq.s32.totalorder %s18, 7
      %p185 = scmp.ne.s32.totalorder %s180, %s182
      %p186 = scmp.eq.s32.totalorder %s18, 0
      %p187 = por %p185, %p186
      %p188 = scmp.ne.s32.totalorder %s180, %s182
      %p189 = scmp.eq.s32.totalorder %s23, 7
      %p190 = por %p188, %p189
      %p191 = scmp.ne.s32.totalorder %s182, %s183
      %p192 = scmp.eq.s32.totalorder %s23, 0
      %p193 = por %p191, %p192
      %p194 = scmp.ne.s32.totalorder %s182, %s183
      %p195 = scmp.eq.s32.totalorder %s24, 7
      %p196 = por %p194, %p195
      %p198 = scmp.ne.s32.totalorder %s183, %s197
      %p199 = scmp.eq.s32.totalorder %s24, 0
      %p200 = por %p198, %p199
      %s202 = sadd.s32 %s201, 1
      %p205 = scmp.eq.s32.totalorder %s18, 7
      %p206 = scmp.ne.s32.totalorder %s201, %s203
      %p207 = scmp.eq.s32.totalorder %s18, 0
      %p208 = por %p206, %p207
      %p209 = scmp.ne.s32.totalorder %s201, %s203
      %p210 = scmp.eq.s32.totalorder %s23, 7
      %p211 = por %p209, %p210
      %p212 = scmp.ne.s32.totalorder %s203, %s204
      %p213 = scmp.eq.s32.totalorder %s23, 0
      %p214 = por %p212, %p213
      %p215 = scmp.ne.s32.totalorder %s203, %s204
      %p216 = scmp.eq.s32.totalorder %s24, 7
      %p217 = por %p215, %p216
      %p219 = scmp.ne.s32.totalorder %s204, %s218
      %p220 = scmp.eq.s32.totalorder %s24, 0
      %p221 = por %p219, %p220
      %s223 = sadd.s32 %s222, 1
      %p226 = scmp.eq.s32.totalorder %s18, 7
      %p227 = scmp.ne.s32.totalorder %s222, %s224
      %p228 = scmp.eq.s32.totalorder %s18, 0
      %p229 = por %p227, %p228
      %p230 = scmp.ne.s32.totalorder %s222, %s224
      %p231 = scmp.eq.s32.totalorder %s23, 7
      %p232 = por %p230, %p231
      %p233 = scmp.ne.s32.totalorder %s224, %s225
      %p234 = scmp.eq.s32.totalorder %s23, 0
      %p235 = por %p233, %p234
      %p236 = scmp.ne.s32.totalorder %s224, %s225
      %p237 = scmp.eq.s32.totalorder %s24, 7
      %p238 = por %p236, %p237
      %p240 = scmp.ne.s32.totalorder %s225, %s239
      %p241 = scmp.eq.s32.totalorder %s24, 0
      %p242 = por %p240, %p241
      %s244 = sadd.s32 %s243, 1
      %p247 = scmp.eq.s32.totalorder %s18, 7
      %p248 = scmp.ne.s32.totalorder %s243, %s245
      %p249 = scmp.eq.s32.totalorder %s18, 0
      %p250 = por %p248, %p249
      %p251 = scmp.ne.s32.totalorder %s243, %s245
      %p252 = scmp.eq.s32.totalorder %s23, 7
      %p253 = por %p251, %p252
      %p254 = scmp.ne.s32.totalorder %s245, %s246
      %p255 = scmp.eq.s32.totalorder %s23, 0
      %p256 = por %p254, %p255
      %p257 = scmp.ne.s32.totalorder %s245, %s246
      %p258 = scmp.eq.s32.totalorder %s24, 7
      %p259 = por %p257, %p258
      %p261 = scmp.ne.s32.totalorder %s246, %s260
      %p262 = scmp.eq.s32.totalorder %s24, 0
      %p263 = por %p261, %p262
      %s264 = ssub.s32 %s25, %s37
      %s265 = ssub.s32 %s26, %s33
      %s266 = sor.u32 %s264, %s265
      %p267 = scmp.eq.s32.totalorder %s266, 0
      %s269 = sadd.s32 %s268, 1
      %s270 = scalar_select %p267, %s268, %s269
      %p273 = pneg %p267
      %p274 = scmp.eq.s32.totalorder %s18, 7
      %p275 = por %p273, %p274
      %p276 = scmp.ne.s32.totalorder %s268, %s271
      %p277 = scmp.eq.s32.totalorder %s18, 0
      %p278 = por %p276, %p277
      %p279 = scmp.ne.s32.totalorder %s268, %s271
      %p280 = scmp.eq.s32.totalorder %s23, 7
      %p281 = por %p279, %p280
      %p282 = scmp.ne.s32.totalorder %s271, %s272
      %p283 = scmp.eq.s32.totalorder %s23, 0
      %p284 = por %p282, %p283
      %p285 = scmp.ne.s32.totalorder %s271, %s272
      %p286 = scmp.eq.s32.totalorder %s24, 7
      %p287 = por %p285, %p286
      %p289 = scmp.ne.s32.totalorder %s272, %s288
      %p290 = scmp.eq.s32.totalorder %s24, 0
      %p291 = por %p289, %p290
      %p292 = scmp.le.s32.totalorder 1, %s18
      %p293 = scmp.lt.s32.totalorder %s18, 9
      %p294 = pnand %p292, %p293
      %p295 = pneg %p294
      // Predicated region
      $region9: #{bottleneck_pallas.1} parent=5 // pred_check
        _
      $region10: #{bottleneck_pallas.1} parent=5 // pred_check_branch
        %297 = sbr.rel (%p294) target = $region12
      $region11: #{bottleneck_pallas.1} parent=5 // pred_region
        %s298 = ssub.s32 %s18, 1
        // Predicated region
        $region13: #{bottleneck_pallas.1} parent=11 // pred_check
          %p299 = pneg %p151
        $region14: #{bottleneck_pallas.1} parent=11 // pred_check_branch
          %301 = sbr.rel (%p299) target = $region16
        $region15: #{bottleneck_pallas.1} parent=11 // pred_region
          _
        $region16: #{bottleneck_pallas.1} parent=11 // pred_fallthru
          _
        // Predicated region
        $region17: #{bottleneck_pallas.1} parent=11 // pred_check
          %p302 = pneg %p172
        $region18: #{bottleneck_pallas.1} parent=11 // pred_check_branch
          %304 = sbr.rel (%p302) target = $region20
        $region19: #{bottleneck_pallas.1} parent=11 // pred_region
          _
        $region20: #{bottleneck_pallas.1} parent=11 // pred_fallthru
          _
        // Predicated region
        $region21: #{bottleneck_pallas.1} parent=11 // pred_check
          %p305 = pneg %p193
        $region22: #{bottleneck_pallas.1} parent=11 // pred_check_branch
          %307 = sbr.rel (%p305) target = $region24
        $region23: #{bottleneck_pallas.1} parent=11 // pred_region
          _
        $region24: #{bottleneck_pallas.1} parent=11 // pred_fallthru
          _
        // Predicated region
        $region25: #{bottleneck_pallas.1} parent=11 // pred_check
          %p308 = pneg %p214
        $region26: #{bottleneck_pallas.1} parent=11 // pred_check_branch
          %310 = sbr.rel (%p308) target = $region28
        $region27: #{bottleneck_pallas.1} parent=11 // pred_region
          _
        $region28: #{bottleneck_pallas.1} parent=11 // pred_fallthru
          _
        // Predicated region
        $region29: #{bottleneck_pallas.1} parent=11 // pred_check
          %p311 = pneg %p235
        $region30: #{bottleneck_pallas.1} parent=11 // pred_check_branch
          %313 = sbr.rel (%p311) target = $region32
        $region31: #{bottleneck_pallas.1} parent=11 // pred_region
          _
        $region32: #{bottleneck_pallas.1} parent=11 // pred_fallthru
          _
        // Predicated region
        $region33: #{bottleneck_pallas.1} parent=11 // pred_check
          %p314 = pneg %p256
        $region34: #{bottleneck_pallas.1} parent=11 // pred_check_branch
          %316 = sbr.rel (%p314) target = $region36
        $region35: #{bottleneck_pallas.1} parent=11 // pred_region
          _
        $region36: #{bottleneck_pallas.1} parent=11 // pred_fallthru
          _
      $region12: #{bottleneck_pallas.1} parent=5 // pred_fallthru
        _
      %p317 = scmp.lt.s32.totalorder %s18, 8
      // Predicated region
      $region37: #{bottleneck_pallas.1} parent=5 // pred_check
        %p318 = pneg %p317
      $region38: #{bottleneck_pallas.1} parent=5 // pred_check_branch
        %320 = sbr.rel (%p318) target = $region40
      $region39: #{bottleneck_pallas.1} parent=5 // pred_region
        // Predicated region
        $region41: #{bottleneck_pallas.1} parent=39 // pred_check
          %p321 = pneg %p52
        $region42: #{bottleneck_pallas.1} parent=39 // pred_check_branch
          %323 = sbr.rel (%p321) target = $region44
        $region43: #{bottleneck_pallas.1} parent=39 // pred_region
          %s324 = smul.u32 4, %s26
          %p325 = scmp.lt.s32.totalorder %s25, 1
          %s326 = scalar_select %p325, %s25, 1
          %p327 = scmp.lt.s32.totalorder %s324, 15
          %s328 = scalar_select %p327, %s324, 15
          %s329 = smul.addr %s328, 2
          %s330 = smul.addr %s326, 32
          %s331 = sadd.s32 %s329, %s330
          %s332 = smul.addr %s331, 4
          %s333 = scalar_lea.vmem %s0, %s332
          %s334 = smul.u32 4, %s26
        $region44: #{bottleneck_pallas.1} parent=39 // pred_fallthru
          _
        // Predicated region
        $region45: #{bottleneck_pallas.1} parent=39 // pred_check
          %p335 = pneg %p88
        $region46: #{bottleneck_pallas.1} parent=39 // pred_check_branch
          %337 = sbr.rel (%p335) target = $region48
        $region47: #{bottleneck_pallas.1} parent=39 // pred_region
          %s338 = smul.u32 %s26, 4
          %s339 = ssub.s32 %s338, 1
          %p340 = scmp.gt.s32.totalorder %s339, 0
          %s341 = scalar_select %p340, %s339, 0
          %p342 = scmp.lt.s32.totalorder %s25, 1
          %s343 = scalar_select %p342, %s25, 1
          %p344 = scmp.lt.s32.totalorder %s341, 15
          %s345 = scalar_select %p344, %s341, 15
          %s346 = smul.addr %s345, 2
          %s347 = smul.addr %s343, 32
          %s348 = sadd.s32 %s346, %s347
          %s349 = smul.addr %s348, 4
          %s350 = scalar_lea.vmem %s1, %s349
          %s351 = smul.u32 %s26, 4
          %s352 = ssub.s32 %s351, 1
          %p353 = scmp.gt.s32.totalorder %s352, 0
          %s354 = scalar_select %p353, %s352, 0
        $region48: #{bottleneck_pallas.1} parent=39 // pred_fallthru
          _
        // Predicated region
        $region49: #{bottleneck_pallas.1} parent=39 // pred_check
          %p355 = pneg %p124
        $region50: #{bottleneck_pallas.1} parent=39 // pred_check_branch
          %357 = sbr.rel (%p355) target = $region52
        $region51: #{bottleneck_pallas.1} parent=39 // pred_region
          %s358 = sadd.s32 %s26, 1
          %s359 = smul.u32 %s358, 4
          %p360 = scmp.lt.s32.totalorder %s359, 15
          %s361 = scalar_select %p360, %s359, 15
          %p362 = scmp.lt.s32.totalorder %s25, 1
          %s363 = scalar_select %p362, %s25, 1
          %p364 = scmp.lt.s32.totalorder %s361, 15
          %s365 = scalar_select %p364, %s361, 15
          %s366 = smul.addr %s365, 2
          %s367 = smul.addr %s363, 32
          %s368 = sadd.s32 %s366, %s367
          %s369 = smul.addr %s368, 4
          %s370 = scalar_lea.vmem %s2, %s369
          %s371 = sadd.s32 %s26, 1
          %s372 = smul.u32 %s371, 4
          %p373 = scmp.lt.s32.totalorder %s372, 15
          %s374 = scalar_select %p373, %s372, 15
        $region52: #{bottleneck_pallas.1} parent=39 // pred_fallthru
          _
      $region40: #{bottleneck_pallas.1} parent=5 // pred_fallthru
        _
      %p375 = scmp.le.s32.totalorder 1, %s18
      %p376 = scmp.lt.s32.totalorder %s18, 9
      %p377 = pnand %p375, %p376
      %p378 = pneg %p377
      // Predicated region
      $region53: #{bottleneck_pallas.1} parent=5 // pred_check
        _
      $region54: #{bottleneck_pallas.1} parent=5 // pred_check_branch
        %380 = sbr.rel (%p377) target = $region56
      $region55: #{bottleneck_pallas.1} parent=5 // pred_region
        %s381 = ssub.s32 %s18, 1
        %s382 = smul.u32 4, %s28
        %p383 = scmp.lt.s32.totalorder %s27, 1
        %s384 = scalar_select %p383, %s27, 1
        %p385 = scmp.lt.s32.totalorder %s382, 15
        %s386 = scalar_select %p385, %s382, 15
        %s387 = smul.addr %s386, 2
        %s388 = smul.addr %s384, 32
        %s389 = sadd.s32 %s387, %s388
        %s390 = smul.addr %s389, 4
        %s391 = scalar_lea.vmem %s0, %s390
        %p392 = pneg %p58
        %p393 = pneg %p55
        %s394 = smul.u32 %s28, 4
        %s395 = ssub.s32 %s394, 1
        %p396 = scmp.gt.s32.totalorder %s395, 0
        %s397 = scalar_select %p396, %s395, 0
        %p398 = scmp.lt.s32.totalorder %s27, 1
        %s399 = scalar_select %p398, %s27, 1
        %p400 = scmp.lt.s32.totalorder %s397, 15
        %s401 = scalar_select %p400, %s397, 15
        %s402 = smul.addr %s401, 2
        %s403 = smul.addr %s399, 32
        %s404 = sadd.s32 %s402, %s403
        %s405 = smul.addr %s404, 4
        %s406 = scalar_lea.vmem %s1, %s405
        %p407 = pneg %p94
        %p408 = pneg %p91
        %s409 = sadd.s32 %s28, 1
        %s410 = smul.u32 %s409, 4
        %p411 = scmp.lt.s32.totalorder %s410, 15
        %s412 = scalar_select %p411, %s410, 15
        %p413 = scmp.lt.s32.totalorder %s27, 1
        %s414 = scalar_select %p413, %s27, 1
        %p415 = scmp.lt.s32.totalorder %s412, 15
        %s416 = scalar_select %p415, %s412, 15
        %s417 = smul.addr %s416, 2
        %s418 = smul.addr %s414, 32
        %s419 = sadd.s32 %s417, %s418
        %s420 = smul.addr %s419, 4
        %s421 = scalar_lea.vmem %s2, %s420
        %p422 = pneg %p130
        %p423 = pneg %p127
        %p424 = pneg %p151
        %p425 = pneg %p148
        %p426 = pneg %p172
        %p427 = pneg %p169
        %p428 = pneg %p193
        %p429 = pneg %p190
        %p430 = pneg %p214
        %p431 = pneg %p211
        %p432 = pneg %p235
        %p433 = pneg %p232
        %p434 = pneg %p256
        %p435 = pneg %p253
        %p436 = pneg %p284
        %p437 = pneg %p281
        %s438 = sand.u32 %s271, 1
        %s439 = scalar_lea.sflag [#allocation4], %s438
        %s440 = sand.u32 %s271, 1
        %s441 = smul.addr %s440, 64
        %s442 = scalar_lea.vmem [#allocation3], %s441
        %s443 = smul.u32 4, %s28
        %p444 = scmp.lt.s32.totalorder %s27, 1
        %s445 = scalar_select %p444, %s27, 1
        %p446 = scmp.lt.s32.totalorder %s443, 15
        %s447 = scalar_select %p446, %s443, 15
        %s448 = smul.addr %s447, 2
        %s449 = smul.addr %s445, 32
        %s450 = sadd.s32 %s448, %s449
        %s451 = smul.addr %s450, 4
        %s452 = scalar_lea.vmem %s0, %s451
        %s453 = smul.u32 4, %s28
        %s454 = smul.u32 %s28, 4
        %s455 = ssub.s32 %s454, 1
        %p456 = scmp.gt.s32.totalorder %s455, 0
        %s457 = scalar_select %p456, %s455, 0
        %p458 = scmp.lt.s32.totalorder %s27, 1
        %s459 = scalar_select %p458, %s27, 1
        %p460 = scmp.lt.s32.totalorder %s457, 15
        %s461 = scalar_select %p460, %s457, 15
        %s462 = smul.addr %s461, 2
        %s463 = smul.addr %s459, 32
        %s464 = sadd.s32 %s462, %s463
        %s465 = smul.addr %s464, 4
        %s466 = scalar_lea.vmem %s1, %s465
        %s467 = smul.u32 %s28, 4
        %s468 = ssub.s32 %s467, 1
        %p469 = scmp.gt.s32.totalorder %s468, 0
        %s470 = scalar_select %p469, %s468, 0
        %s471 = sadd.s32 %s28, 1
        %s472 = smul.u32 %s471, 4
        %p473 = scmp.lt.s32.totalorder %s472, 15
        %s474 = scalar_select %p473, %s472, 15
        %p475 = scmp.lt.s32.totalorder %s27, 1
        %s476 = scalar_select %p475, %s27, 1
        %p477 = scmp.lt.s32.totalorder %s474, 15
        %s478 = scalar_select %p477, %s474, 15
        %s479 = smul.addr %s478, 2
        %s480 = smul.addr %s476, 32
        %s481 = sadd.s32 %s479, %s480
        %s482 = smul.addr %s481, 4
        %s483 = scalar_lea.vmem %s2, %s482
        %s484 = sadd.s32 %s28, 1
        %s485 = smul.u32 %s484, 4
        %p486 = scmp.lt.s32.totalorder %s485, 15
        %s487 = scalar_select %p486, %s485, 15
        %s488 = smul.u32 4, %s28
        %p490 = scmp.eq.s32.totalorder %s28, 0
        %p491 = scmp.eq.s32.totalorder %s28, 3
        %v492 = vld [vmem:[%s3] sm:$0xf]
        %v493 = vld [vmem:[%s3 + $0x4] sm:$0xf]
        %v494 = vld [vmem:[%s3 + $0x8] sm:$0xf]
        %v495 = vld [vmem:[%s3 + $0xc] sm:$0xf]
        %v496 = vld [vmem:[%s3 + $0x10] sm:$0xf]
        %v497 = vld [vmem:[%s3 + $0x14] sm:$0xf]
        %v498 = vld [vmem:[%s3 + $0x18] sm:$0xf]
        %v499 = vld [vmem:[%s3 + $0x1c] sm:$0xf]
        %v500 = vld [vmem:[%s3 + $0x20] sm:$0xf]
        %v501 = vld [vmem:[%s3 + $0x24] sm:$0xf]
        %v502 = vld [vmem:[%s3 + $0x28] sm:$0xf]
        %v503 = vld [vmem:[%s3 + $0x2c] sm:$0xf]
        %v504 = vld [vmem:[%s3 + $0x30] sm:$0xf]
        %v505 = vld [vmem:[%s3 + $0x34] sm:$0xf]
        %v506 = vld [vmem:[%s3 + $0x38] sm:$0xf]
        %v507 = vld [vmem:[%s3 + $0x3c] sm:$0xf]
        %v508 = vld [vmem:[%s4] sm:$0x1]
        %v509 = vld [vmem:[%s452] sm:$0xf]
        %v510 = vld [vmem:[%s452 + $0x4] sm:$0xf]
        %v511 = vld [vmem:[%s452 + $0x8] sm:$0xf]
        %v512 = vld [vmem:[%s452 + $0xc] sm:$0xf]
        %v513 = vld [vmem:[%s452 + $0x10] sm:$0xf]
        %v514 = vld [vmem:[%s452 + $0x14] sm:$0xf]
        %v515 = vld [vmem:[%s452 + $0x18] sm:$0xf]
        %v516 = vld [vmem:[%s452 + $0x1c] sm:$0xf]
        %v518 = vlaneseq
        %v519 = vshrl.u32 %v518, 7
        %v520 = vsub.s32 0, %v519
        %v521 = vrot.slane %v508, %v520
        %v531 = vunpack.c.l.b16 %v509
        %v532 = vunpack.c.l.b16 %v510
        %v533 = vunpack.c.l.b16 %v511
        %v534 = vunpack.c.l.b16 %v512
        %v535 = vunpack.c.l.b16 %v513
        %v536 = vunpack.c.l.b16 %v514
        %v537 = vunpack.c.l.b16 %v515
        %v538 = vunpack.c.l.b16 %v516
        %v539 = vpack.c.b16 %v532, %v531
        %v540 = vpack.c.b16 %v534, %v533
        %v541 = vpack.c.b16 %v536, %v535
        %v542 = vpack.c.b16 %v538, %v537
        %v563 = vunpack.c.l.b16 %v492
        %v564 = vunpack.c.l.b16 %v493
        %v565 = vunpack.c.l.b16 %v494
        %v566 = vunpack.c.l.b16 %v495
        %v567 = vunpack.c.l.b16 %v496
        %v568 = vunpack.c.l.b16 %v497
        %v569 = vunpack.c.l.b16 %v498
        %v570 = vunpack.c.l.b16 %v499
        %v571 = vunpack.c.l.b16 %v500
        %v572 = vunpack.c.l.b16 %v501
        %v573 = vunpack.c.l.b16 %v502
        %v574 = vunpack.c.l.b16 %v503
        %v575 = vunpack.c.l.b16 %v504
        %v576 = vunpack.c.l.b16 %v505
        %v577 = vunpack.c.l.b16 %v506
        %v578 = vunpack.c.l.b16 %v507
        %v579 = vpack.c.b16 %v564, %v563
        %v580 = vpack.c.b16 %v566, %v565
        %v581 = vpack.c.b16 %v568, %v567
        %v582 = vpack.c.b16 %v570, %v569
        %v583 = vpack.c.b16 %v572, %v571
        %v584 = vpack.c.b16 %v574, %v573
        %v585 = vpack.c.b16 %v576, %v575
        %v586 = vpack.c.b16 %v578, %v577
        %595 = vmatprep.subr.bf16.mxu0 0
        %596 = vmatpush1.bf16.msra.mxu0 %v579
        %597 = vmatprep.subr.bf16.mxu0 0
        %598 = vmatpush1.bf16.msra.mxu0 %v580
        %599 = vmatprep.subr.bf16.mxu0 0
        %600 = vmatpush1.bf16.msra.mxu0 %v581
        %601 = vmatprep.subr.bf16.mxu0 0
        %602 = vmatpush1.bf16.msra.mxu0 %v582
        %603 = vmatprep.subr.bf16.mxu0 0
        %604 = vmatpush1.bf16.msra.mxu0 %v583
        %605 = vmatprep.subr.bf16.mxu0 0
        %606 = vmatpush1.bf16.msra.mxu0 %v584
        %607 = vmatprep.subr.bf16.mxu0 0
        %608 = vmatpush1.bf16.msra.mxu0 %v585
        %609 = vmatprep.subr.bf16.mxu0 0
        %610 = vmatpush1.bf16.msra.mxu0 %v586
        %611 = vmatprep.subr.bf16.mxu0 0
        %612 = vmatpush1.bf16.msra.mxu0 0
        %613 = vmatprep.subr.bf16.mxu0 0
        %614 = vmatpush1.bf16.msra.mxu0 0
        %615 = vmatprep.subr.bf16.mxu0 0
        %616 = vmatpush1.bf16.msra.mxu0 0
        %617 = vmatprep.subr.bf16.mxu0 0
        %618 = vmatpush1.bf16.msra.mxu0 0
        %619 = vmatprep.subr.bf16.mxu0 0
        %620 = vmatpush1.bf16.msra.mxu0 0
        %621 = vmatprep.subr.bf16.mxu0 0
        %622 = vmatpush1.bf16.msra.mxu0 0
        %623 = vmatprep.subr.bf16.mxu0 0
        %624 = vmatpush1.bf16.msra.mxu0 0
        %625 = vmatprep.subr.bf16.mxu0 0
        %626 = vmatpush1.bf16.msra.mxu0 0
        %627 = vmatprep.mubr.bf16.mxu0 0
        %628 = vmatmul.mubr.bf16.gmra.mrb[0].mxu0 %v539
        %v629 = vpop.f32.mrb[0].mxu0
        %v630 = vadd.f32 %v521, %v629
        %v631 = vpop.f32.mrb[0].mxu0
        %v632 = vpop.f32.mrb[0].mxu0
        %v633 = vadd.f32 %v521, %v632
        %v634 = vpop.f32.mrb[0].mxu0
        %635 = vmatprep.mubr.bf16.mxu0 0
        %636 = vmatmul.mubr.bf16.gmra.mrb[0].mxu0 %v540
        %v637 = vpop.f32.mrb[0].mxu0
        %v638 = vadd.f32 %v521, %v637
        %v639 = vpop.f32.mrb[0].mxu0
        %v640 = vpop.f32.mrb[0].mxu0
        %v641 = vadd.f32 %v521, %v640
        %v642 = vpop.f32.mrb[0].mxu0
        %643 = vmatprep.mubr.bf16.mxu0 0
        %644 = vmatmul.mubr.bf16.gmra.mrb[0].mxu0 %v541
        %v645 = vpop.f32.mrb[0].mxu0
        %v646 = vadd.f32 %v521, %v645
        %v647 = vpop.f32.mrb[0].mxu0
        %v648 = vpop.f32.mrb[0].mxu0
        %v649 = vadd.f32 %v521, %v648
        %v650 = vpop.f32.mrb[0].mxu0
        %651 = vmatprep.mubr.bf16.mxu0 0
        %652 = vmatmul.mubr.bf16.gmra.mrb[0].mxu0 %v542
        %v653 = vpop.f32.mrb[0].mxu0
        %v654 = vadd.f32 %v521, %v653
        %v655 = vpop.f32.mrb[0].mxu0
        %v656 = vpop.f32.mrb[0].mxu0
        %v657 = vadd.f32 %v521, %v656
        %v658 = vpop.f32.mrb[0].mxu0
        %659 = vdwg.mxu0
        %v660 = vmax.f32 %v630, 0.0
        %v661 = vmax.f32 %v633, 0.0
        %v662 = vmax.f32 %v638, 0.0
        %v663 = vmax.f32 %v641, 0.0
        %v664 = vmax.f32 %v646, 0.0
        %v665 = vmax.f32 %v649, 0.0
        %v666 = vmax.f32 %v654, 0.0
        %v667 = vmax.f32 %v657, 0.0
        %s668 = scalar_lea.vmem [#allocation2], 16
        %669 = vst [vmem:[%s668] sm:$0xff] %v660
        %670 = vst [vmem:[%s668 + $0x8] sm:$0xff] %v661
        %671 = vst [vmem:[%s668 + $0x10] sm:$0xff] %v662
        %672 = vst [vmem:[%s668 + $0x18] sm:$0xff] %v663
        %673 = vst [vmem:[%s668 + $0x20] sm:$0xff] %v664
        %674 = vst [vmem:[%s668 + $0x28] sm:$0xff] %v665
        %675 = vst [vmem:[%s668 + $0x30] sm:$0xff] %v666
        %676 = vst [vmem:[%s668 + $0x38] sm:$0xff] %v667
        %v677 = vld [vmem:[%s466] sm:$0xf]
        %v678 = vld [vmem:[%s466 + $0x4] sm:$0xf]
        %v681 = vunpack.c.l.b16 %v677
        %v682 = vunpack.c.l.b16 %v678
        %v683 = vpack.c.b16 %v682, %v681
        %685 = vmatprep.subr.bf16.mxu0 0
        %686 = vmatpush1.bf16.msra.mxu0 %v579
        %687 = vmatprep.subr.bf16.mxu0 0
        %688 = vmatpush1.bf16.msra.mxu0 %v580
        %689 = vmatprep.subr.bf16.mxu0 0
        %690 = vmatpush1.bf16.msra.mxu0 %v581
        %691 = vmatprep.subr.bf16.mxu0 0
        %692 = vmatpush1.bf16.msra.mxu0 %v582
        %693 = vmatprep.subr.bf16.mxu0 0
        %694 = vmatpush1.bf16.msra.mxu0 %v583
        %695 = vmatprep.subr.bf16.mxu0 0
        %696 = vmatpush1.bf16.msra.mxu0 %v584
        %697 = vmatprep.subr.bf16.mxu0 0
        %698 = vmatpush1.bf16.msra.mxu0 %v585
        %699 = vmatprep.subr.bf16.mxu0 0
        %700 = vmatpush1.bf16.msra.mxu0 %v586
        %701 = vmatprep.subr.bf16.mxu0 0
        %702 = vmatpush1.bf16.msra.mxu0 0
        %703 = vmatprep.subr.bf16.mxu0 0
        %704 = vmatpush1.bf16.msra.mxu0 0
        %705 = vmatprep.subr.bf16.mxu0 0
        %706 = vmatpush1.bf16.msra.mxu0 0
        %707 = vmatprep.subr.bf16.mxu0 0
        %708 = vmatpush1.bf16.msra.mxu0 0
        %709 = vmatprep.subr.bf16.mxu0 0
        %710 = vmatpush1.bf16.msra.mxu0 0
        %711 = vmatprep.subr.bf16.mxu0 0
        %712 = vmatpush1.bf16.msra.mxu0 0
        %713 = vmatprep.subr.bf16.mxu0 0
        %714 = vmatpush1.bf16.msra.mxu0 0
        %715 = vmatprep.subr.bf16.mxu0 0
        %716 = vmatpush1.bf16.msra.mxu0 0
        %717 = vmatprep.mubr.bf16.mxu0 0
        %718 = vmatmul.mubr.bf16.gmra.mrb[0].mxu0 %v683
        %v719 = vpop.f32.mrb[0].mxu0
        %v720 = vadd.f32 %v521, %v719
        %v721 = vpop.f32.mrb[0].mxu0
        %v722 = vpop.f32.mrb[0].mxu0
        %v723 = vadd.f32 %v521, %v722
        %v724 = vpop.f32.mrb[0].mxu0
        %725 = vdwg.mxu0
        %v726 = vmax.f32 %v720, 0.0
        %v727 = vmax.f32 %v723, 0.0
        %v728 = vld [vmem:[%s483] sm:$0xf]
        %v729 = vld [vmem:[%s483 + $0x4] sm:$0xf]
        %v732 = vunpack.c.l.b16 %v728
        %v733 = vunpack.c.l.b16 %v729
        %v734 = vpack.c.b16 %v733, %v732
        %736 = vmatprep.subr.bf16.mxu0 0
        %737 = vmatpush1.bf16.msra.mxu0 %v579
        %738 = vmatprep.subr.bf16.mxu0 0
        %739 = vmatpush1.bf16.msra.mxu0 %v580
        %740 = vmatprep.subr.bf16.mxu0 0
        %741 = vmatpush1.bf16.msra.mxu0 %v581
        %742 = vmatprep.subr.bf16.mxu0 0
        %743 = vmatpush1.bf16.msra.mxu0 %v582
        %744 = vmatprep.subr.bf16.mxu0 0
        %745 = vmatpush1.bf16.msra.mxu0 %v583
        %746 = vmatprep.subr.bf16.mxu0 0
        %747 = vmatpush1.bf16.msra.mxu0 %v584
        %748 = vmatprep.subr.bf16.mxu0 0
        %749 = vmatpush1.bf16.msra.mxu0 %v585
        %750 = vmatprep.subr.bf16.mxu0 0
        %751 = vmatpush1.bf16.msra.mxu0 %v586
        %752 = vmatprep.subr.bf16.mxu0 0
        %753 = vmatpush1.bf16.msra.mxu0 0
        %754 = vmatprep.subr.bf16.mxu0 0
        %755 = vmatpush1.bf16.msra.mxu0 0
        %756 = vmatprep.subr.bf16.mxu0 0
        %757 = vmatpush1.bf16.msra.mxu0 0
        %758 = vmatprep.subr.bf16.mxu0 0
        %759 = vmatpush1.bf16.msra.mxu0 0
        %760 = vmatprep.subr.bf16.mxu0 0
        %761 = vmatpush1.bf16.msra.mxu0 0
        %762 = vmatprep.subr.bf16.mxu0 0
        %763 = vmatpush1.bf16.msra.mxu0 0
        %764 = vmatprep.subr.bf16.mxu0 0
        %765 = vmatpush1.bf16.msra.mxu0 0
        %766 = vmatprep.subr.bf16.mxu0 0
        %767 = vmatpush1.bf16.msra.mxu0 0
        %768 = vmatprep.mubr.bf16.mxu0 0
        %769 = vmatmul.mubr.bf16.gmra.mrb[0].mxu0 %v734
        %v770 = vpop.f32.mrb[0].mxu0
        %v771 = vadd.f32 %v521, %v770
        %v772 = vpop.f32.mrb[0].mxu0
        %v773 = vpop.f32.mrb[0].mxu0
        %v774 = vadd.f32 %v521, %v773
        %v775 = vpop.f32.mrb[0].mxu0
        %776 = vdwg.mxu0
        %v777 = vmax.f32 %v771, 0.0
        %v778 = vmax.f32 %v774, 0.0
        %s779 = scalar_select %p490, 1, 0
        %v780 = vstv %s779
        %vm781 = vcmp.eq.s32.totalorder %v780, 1
        %v782 = vsel %vm781, 0.0, %v726
        %v783 = vsel %vm781, 0.0, %v727
        %784 = vst [vmem:[#allocation2] sm:$0xff] %v782
        %785 = vst [vmem:[#allocation2 + $0x8] sm:$0xff] %v783
        %s786 = scalar_select %p491, 1, 0
        %v787 = vstv %s786
        %vm788 = vcmp.eq.s32.totalorder %v787, 1
        %v789 = vsel %vm788, 0.0, %v777
        %v790 = vsel %vm788, 0.0, %v778
        %s791 = scalar_lea.vmem [#allocation2], 80
        %792 = vst [vmem:[%s791] sm:$0xff] %v789
        %793 = vst [vmem:[%s791 + $0x8] sm:$0xff] %v790
        %v794 = vld [vmem:[#allocation2] sm:$0xff]
        %v795 = vld [vmem:[#allocation2 + $0x8] sm:$0xff]
        %v796 = vld [vmem:[#allocation2 + $0x10] sm:$0xff]
        %v797 = vld [vmem:[#allocation2 + $0x18] sm:$0xff]
        %v798 = vld [vmem:[#allocation2 + $0x20] sm:$0xff]
        %v799 = vld [vmem:[#allocation2 + $0x28] sm:$0xff]
        %v800 = vld [vmem:[#allocation2 + $0x30] sm:$0xff]
        %v801 = vld [vmem:[#allocation2 + $0x38] sm:$0xff]
        %v802 = vld [vmem:[#allocation2 + $0x40] sm:$0xff]
        %v803 = vld [vmem:[#allocation2 + $0x48] sm:$0xff]
        %v804 = vld [vmem:[#allocation2 + $0x50] sm:$0xff]
        %v805 = vld [vmem:[#allocation2 + $0x58] sm:$0xff]
        %v806 = vlaneseq
        %v807 = vshrl.u32 %v806, 7
        %v808 = vadd.s32 %v807, 8
        %vm809 = vcmp.eq.s32.totalorder %v807, 0
        %vm810 = vcmp.eq.s32.totalorder %v808, 0
        %v811 = vrot.slane %v794, 7
        %v812 = vrot.slane %v796, 7
        %v813 = vrot.slane %v798, 7
        %v814 = vrot.slane %v800, 7
        %v815 = vrot.slane %v802, 7
        %v816 = vrot.slane %v804, 7
        %v817 = vrot.slane %v795, 7
        %v818 = vrot.slane %v797, 7
        %v819 = vrot.slane %v799, 7
        %v820 = vrot.slane %v801, 7
        %v821 = vrot.slane %v803, 7
        %v822 = vrot.slane %v805, 7
        %vm823 = vcmp.lt.s32.totalorder %v807, 1
        %v824 = vsel %vm823, %v811, %v817
        %v825 = vsel %vm823, %v812, %v818
        %v826 = vsel %vm823, %v813, %v819
        %v827 = vsel %vm823, %v814, %v820
        %v828 = vsel %vm823, %v815, %v821
        %v829 = vsel %vm823, %v816, %v822
        %v830 = vsel %vm823, %v817, %v811
        %v831 = vsel %vm823, %v818, %v812
        %v832 = vsel %vm823, %v819, %v813
        %v833 = vsel %vm823, %v820, %v814
        %v834 = vsel %vm823, %v821, %v815
        %v835 = vsel %vm823, %v822, %v816
        %v836 = vsel %vm809, 1, 0
        %v837 = vsel %vm810, 1, 0
        %vm838 = vcmp.eq.s32.totalorder %v836, 1
        %vm839 = vcmp.eq.s32.totalorder %v837, 1
        %v840 = vsel %vm838, 0.0, %v830
        %v841 = vsel %vm839, 0.0, %v824
        %v842 = vsel %vm838, 0.0, %v831
        %v843 = vsel %vm839, 0.0, %v825
        %v844 = vsel %vm838, 0.0, %v832
        %v845 = vsel %vm839, 0.0, %v826
        %v846 = vsel %vm838, 0.0, %v833
        %v847 = vsel %vm839, 0.0, %v827
        %v848 = vsel %vm838, 0.0, %v834
        %v849 = vsel %vm839, 0.0, %v828
        %v850 = vsel %vm838, 0.0, %v835
        %v851 = vsel %vm839, 0.0, %v829
        %vm852 = vcmp.eq.s32.totalorder %v807, 15
        %vm853 = vcmp.eq.s32.totalorder %v808, 15
        %v854 = vrot.slane %v794, 1
        %v855 = vrot.slane %v796, 1
        %v856 = vrot.slane %v798, 1
        %v857 = vrot.slane %v800, 1
        %v858 = vrot.slane %v802, 1
        %v859 = vrot.slane %v804, 1
        %v860 = vrot.slane %v795, 1
        %v861 = vrot.slane %v797, 1
        %v862 = vrot.slane %v799, 1
        %v863 = vrot.slane %v801, 1
        %v864 = vrot.slane %v803, 1
        %v865 = vrot.slane %v805, 1
        %vm866 = vcmp.lt.s32.totalorder %v807, 7
        %v867 = vsel %vm866, %v854, %v860
        %v868 = vsel %vm866, %v855, %v861
        %v869 = vsel %vm866, %v856, %v862
        %v870 = vsel %vm866, %v857, %v863
        %v871 = vsel %vm866, %v858, %v864
        %v872 = vsel %vm866, %v859, %v865
        %v873 = vsel %vm866, %v860, %v854
        %v874 = vsel %vm866, %v861, %v855
        %v875 = vsel %vm866, %v862, %v856
        %v876 = vsel %vm866, %v863, %v857
        %v877 = vsel %vm866, %v864, %v858
        %v878 = vsel %vm866, %v865, %v859
        %v879 = vsel %vm852, 1, 0
        %v880 = vsel %vm853, 1, 0
        %vm881 = vcmp.eq.s32.totalorder %v879, 1
        %vm882 = vcmp.eq.s32.totalorder %v880, 1
        %v883 = vsel %vm881, 0.0, %v867
        %v884 = vsel %vm882, 0.0, %v873
        %v885 = vsel %vm881, 0.0, %v868
        %v886 = vsel %vm882, 0.0, %v874
        %v887 = vsel %vm881, 0.0, %v869
        %v888 = vsel %vm882, 0.0, %v875
        %v889 = vsel %vm881, 0.0, %v870
        %v890 = vsel %vm882, 0.0, %v876
        %v891 = vsel %vm881, 0.0, %v871
        %v892 = vsel %vm882, 0.0, %v877
        %v893 = vsel %vm881, 0.0, %v872
        %v894 = vsel %vm882, 0.0, %v878
        %v895 = vpack.c.bf16 %v841, %v840
        %v896 = vpack.c.bf16 %v843, %v842
        %v897 = vpack.c.bf16 %v845, %v844
        %v898 = vpack.c.bf16 %v847, %v846
        %v899 = vpack.c.bf16 %v849, %v848
        %v900 = vpack.c.bf16 %v851, %v850
        %v901 = vpack.c.bf16 %v795, %v794
        %v902 = vpack.c.bf16 %v797, %v796
        %v903 = vpack.c.bf16 %v799, %v798
        %v904 = vpack.c.bf16 %v801, %v800
        %v905 = vpack.c.bf16 %v803, %v802
        %v906 = vpack.c.bf16 %v805, %v804
        %v907 = vpack.c.bf16 %v884, %v883
        %v908 = vpack.c.bf16 %v886, %v885
        %v909 = vpack.c.bf16 %v888, %v887
        %v910 = vpack.c.bf16 %v890, %v889
        %v911 = vpack.c.bf16 %v892, %v891
        %v912 = vpack.c.bf16 %v894, %v893
        %v913 = vld [vmem:[%s5] sm:$0xf]
        %v914 = vld [vmem:[%s5 + $0x4] sm:$0xf]
        %v915 = vld [vmem:[%s5 + $0x8] sm:$0xf]
        %v916 = vld [vmem:[%s5 + $0xc] sm:$0xf]
        %v917 = vld [vmem:[%s5 + $0x10] sm:$0xf]
        %v918 = vld [vmem:[%s5 + $0x14] sm:$0xf]
        %v919 = vld [vmem:[%s5 + $0x18] sm:$0xf]
        %v920 = vld [vmem:[%s5 + $0x1c] sm:$0xf]
        %v921 = vld [vmem:[%s5 + $0x20] sm:$0xf]
        %v922 = vld [vmem:[%s5 + $0x24] sm:$0xf]
        %v923 = vld [vmem:[%s5 + $0x28] sm:$0xf]
        %v924 = vld [vmem:[%s5 + $0x2c] sm:$0xf]
        %v925 = vld [vmem:[%s5 + $0x30] sm:$0xf]
        %v926 = vld [vmem:[%s5 + $0x34] sm:$0xf]
        %v927 = vld [vmem:[%s5 + $0x38] sm:$0xf]
        %v928 = vld [vmem:[%s5 + $0x3c] sm:$0xf]
        %v929 = vld [vmem:[%s5 + $0x40] sm:$0xf]
        %v930 = vld [vmem:[%s5 + $0x44] sm:$0xf]
        %v931 = vld [vmem:[%s5 + $0x48] sm:$0xf]
        %v932 = vld [vmem:[%s5 + $0x4c] sm:$0xf]
        %v933 = vld [vmem:[%s5 + $0x50] sm:$0xf]
        %v934 = vld [vmem:[%s5 + $0x54] sm:$0xf]
        %v935 = vld [vmem:[%s5 + $0x58] sm:$0xf]
        %v936 = vld [vmem:[%s5 + $0x5c] sm:$0xf]
        %v937 = vld [vmem:[%s5 + $0x60] sm:$0xf]
        %v938 = vld [vmem:[%s5 + $0x64] sm:$0xf]
        %v939 = vld [vmem:[%s5 + $0x68] sm:$0xf]
        %v940 = vld [vmem:[%s5 + $0x6c] sm:$0xf]
        %v941 = vld [vmem:[%s5 + $0x70] sm:$0xf]
        %v942 = vld [vmem:[%s5 + $0x74] sm:$0xf]
        %v943 = vld [vmem:[%s5 + $0x78] sm:$0xf]
        %v944 = vld [vmem:[%s5 + $0x7c] sm:$0xf]
        %v945 = vld [vmem:[%s5 + $0x80] sm:$0xf]
        %v946 = vld [vmem:[%s5 + $0x84] sm:$0xf]
        %v947 = vld [vmem:[%s5 + $0x88] sm:$0xf]
        %v948 = vld [vmem:[%s5 + $0x8c] sm:$0xf]
        %v949 = vld [vmem:[%s5 + $0x90] sm:$0xf]
        %v950 = vld [vmem:[%s5 + $0x94] sm:$0xf]
        %v951 = vld [vmem:[%s5 + $0x98] sm:$0xf]
        %v952 = vld [vmem:[%s5 + $0x9c] sm:$0xf]
        %v953 = vld [vmem:[%s5 + $0xa0] sm:$0xf]
        %v954 = vld [vmem:[%s5 + $0xa4] sm:$0xf]
        %v955 = vld [vmem:[%s5 + $0xa8] sm:$0xf]
        %v956 = vld [vmem:[%s5 + $0xac] sm:$0xf]
        %v957 = vld [vmem:[%s5 + $0xb0] sm:$0xf]
        %v958 = vld [vmem:[%s5 + $0xb4] sm:$0xf]
        %v959 = vld [vmem:[%s5 + $0xb8] sm:$0xf]
        %v960 = vld [vmem:[%s5 + $0xbc] sm:$0xf]
        %v961 = vld [vmem:[%s5 + $0xc0] sm:$0xf]
        %v962 = vld [vmem:[%s5 + $0xc4] sm:$0xf]
        %v963 = vld [vmem:[%s5 + $0xc8] sm:$0xf]
        %v964 = vld [vmem:[%s5 + $0xcc] sm:$0xf]
        %v965 = vld [vmem:[%s5 + $0xd0] sm:$0xf]
        %v966 = vld [vmem:[%s5 + $0xd4] sm:$0xf]
        %v967 = vld [vmem:[%s5 + $0xd8] sm:$0xf]
        %v968 = vld [vmem:[%s5 + $0xdc] sm:$0xf]
        %v969 = vld [vmem:[%s5 + $0xe0] sm:$0xf]
        %v970 = vld [vmem:[%s5 + $0xe4] sm:$0xf]
        %v971 = vld [vmem:[%s5 + $0xe8] sm:$0xf]
        %v972 = vld [vmem:[%s5 + $0xec] sm:$0xf]
        %v973 = vld [vmem:[%s5 + $0xf0] sm:$0xf]
        %v974 = vld [vmem:[%s5 + $0xf4] sm:$0xf]
        %v975 = vld [vmem:[%s5 + $0xf8] sm:$0xf]
        %v976 = vld [vmem:[%s5 + $0xfc] sm:$0xf]
        %v977 = vld [vmem:[%s5 + $0x100] sm:$0xf]
        %v978 = vld [vmem:[%s5 + $0x104] sm:$0xf]
        %v979 = vld [vmem:[%s5 + $0x108] sm:$0xf]
        %v980 = vld [vmem:[%s5 + $0x10c] sm:$0xf]
        %v981 = vld [vmem:[%s5 + $0x110] sm:$0xf]
        %v982 = vld [vmem:[%s5 + $0x114] sm:$0xf]
        %v983 = vld [vmem:[%s5 + $0x118] sm:$0xf]
        %v984 = vld [vmem:[%s5 + $0x11c] sm:$0xf]
        %v985 = vld [vmem:[%s5 + $0x120] sm:$0xf]
        %v986 = vld [vmem:[%s5 + $0x124] sm:$0xf]
        %v987 = vld [vmem:[%s5 + $0x128] sm:$0xf]
        %v988 = vld [vmem:[%s5 + $0x12c] sm:$0xf]
        %v989 = vld [vmem:[%s5 + $0x130] sm:$0xf]
        %v990 = vld [vmem:[%s5 + $0x134] sm:$0xf]
        %v991 = vld [vmem:[%s5 + $0x138] sm:$0xf]
        %v992 = vld [vmem:[%s5 + $0x13c] sm:$0xf]
        %v993 = vld [vmem:[%s5 + $0x140] sm:$0xf]
        %v994 = vld [vmem:[%s5 + $0x144] sm:$0xf]
        %v995 = vld [vmem:[%s5 + $0x148] sm:$0xf]
        %v996 = vld [vmem:[%s5 + $0x14c] sm:$0xf]
        %v997 = vld [vmem:[%s5 + $0x150] sm:$0xf]
        %v998 = vld [vmem:[%s5 + $0x154] sm:$0xf]
        %v999 = vld [vmem:[%s5 + $0x158] sm:$0xf]
        %v1000 = vld [vmem:[%s5 + $0x15c] sm:$0xf]
        %v1001 = vld [vmem:[%s5 + $0x160] sm:$0xf]
        %v1002 = vld [vmem:[%s5 + $0x164] sm:$0xf]
        %v1003 = vld [vmem:[%s5 + $0x168] sm:$0xf]
        %v1004 = vld [vmem:[%s5 + $0x16c] sm:$0xf]
        %v1005 = vld [vmem:[%s5 + $0x170] sm:$0xf]
        %v1006 = vld [vmem:[%s5 + $0x174] sm:$0xf]
        %v1007 = vld [vmem:[%s5 + $0x178] sm:$0xf]
        %v1008 = vld [vmem:[%s5 + $0x17c] sm:$0xf]
        %v1057 = vunpack.c.l.b16 %v961
        %v1058 = vunpack.c.l.b16 %v962
        %v1059 = vunpack.c.l.b16 %v963
        %v1060 = vunpack.c.l.b16 %v964
        %v1061 = vunpack.c.l.b16 %v965
        %v1062 = vunpack.c.l.b16 %v966
        %v1063 = vunpack.c.l.b16 %v967
        %v1064 = vunpack.c.l.b16 %v968
        %v1065 = vunpack.c.l.b16 %v969
        %v1066 = vunpack.c.l.b16 %v970
        %v1067 = vunpack.c.l.b16 %v971
        %v1068 = vunpack.c.l.b16 %v972
        %v1069 = vunpack.c.l.b16 %v973
        %v1070 = vunpack.c.l.b16 %v974
        %v1071 = vunpack.c.l.b16 %v975
        %v1072 = vunpack.c.l.b16 %v976
        %v1073 = vunpack.c.l.b16 %v977
        %v1074 = vunpack.c.l.b16 %v978
        %v1075 = vunpack.c.l.b16 %v979
        %v1076 = vunpack.c.l.b16 %v980
        %v1077 = vunpack.c.l.b16 %v981
        %v1078 = vunpack.c.l.b16 %v982
        %v1079 = vunpack.c.l.b16 %v983
        %v1080 = vunpack.c.l.b16 %v984
        %v1081 = vunpack.c.l.b16 %v985
        %v1082 = vunpack.c.l.b16 %v986
        %v1083 = vunpack.c.l.b16 %v987
        %v1084 = vunpack.c.l.b16 %v988
        %v1085 = vunpack.c.l.b16 %v989
        %v1086 = vunpack.c.l.b16 %v990
        %v1087 = vunpack.c.l.b16 %v991
        %v1088 = vunpack.c.l.b16 %v992
        %v1089 = vunpack.c.l.b16 %v993
        %v1090 = vunpack.c.l.b16 %v994
        %v1091 = vunpack.c.l.b16 %v995
        %v1092 = vunpack.c.l.b16 %v996
        %v1093 = vunpack.c.l.b16 %v997
        %v1094 = vunpack.c.l.b16 %v998
        %v1095 = vunpack.c.l.b16 %v999
        %v1096 = vunpack.c.l.b16 %v1000
        %v1097 = vunpack.c.l.b16 %v1001
        %v1098 = vunpack.c.l.b16 %v1002
        %v1099 = vunpack.c.l.b16 %v1003
        %v1100 = vunpack.c.l.b16 %v1004
        %v1101 = vunpack.c.l.b16 %v1005
        %v1102 = vunpack.c.l.b16 %v1006
        %v1103 = vunpack.c.l.b16 %v1007
        %v1104 = vunpack.c.l.b16 %v1008
        %v1105 = vpack.c.b16 %v1058, %v1057
        %v1106 = vpack.c.b16 %v1060, %v1059
        %v1107 = vpack.c.b16 %v1062, %v1061
        %v1108 = vpack.c.b16 %v1064, %v1063
        %v1109 = vpack.c.b16 %v1066, %v1065
        %v1110 = vpack.c.b16 %v1068, %v1067
        %v1111 = vpack.c.b16 %v1070, %v1069
        %v1112 = vpack.c.b16 %v1072, %v1071
        %v1113 = vpack.c.b16 %v1074, %v1073
        %v1114 = vpack.c.b16 %v1076, %v1075
        %v1115 = vpack.c.b16 %v1078, %v1077
        %v1116 = vpack.c.b16 %v1080, %v1079
        %v1117 = vpack.c.b16 %v1082, %v1081
        %v1118 = vpack.c.b16 %v1084, %v1083
        %v1119 = vpack.c.b16 %v1086, %v1085
        %v1120 = vpack.c.b16 %v1088, %v1087
        %v1121 = vpack.c.b16 %v1090, %v1089
        %v1122 = vpack.c.b16 %v1092, %v1091
        %v1123 = vpack.c.b16 %v1094, %v1093
        %v1124 = vpack.c.b16 %v1096, %v1095
        %v1125 = vpack.c.b16 %v1098, %v1097
        %v1126 = vpack.c.b16 %v1100, %v1099
        %v1127 = vpack.c.b16 %v1102, %v1101
        %v1128 = vpack.c.b16 %v1104, %v1103
        %1153 = vmatprep.subr.bf16.mxu0 0
        %1154 = vmatpush1.bf16.msra.mxu0 %v1105
        %1155 = vmatprep.subr.bf16.mxu0 0
        %1156 = vmatpush1.bf16.msra.mxu0 %v1106
        %1157 = vmatprep.subr.bf16.mxu0 0
        %1158 = vmatpush1.bf16.msra.mxu0 %v1107
        %1159 = vmatprep.subr.bf16.mxu0 0
        %1160 = vmatpush1.bf16.msra.mxu0 %v1108
        %1161 = vmatprep.subr.bf16.mxu0 0
        %1162 = vmatpush1.bf16.msra.mxu0 %v1109
        %1163 = vmatprep.subr.bf16.mxu0 0
        %1164 = vmatpush1.bf16.msra.mxu0 %v1110
        %1165 = vmatprep.subr.bf16.mxu0 0
        %1166 = vmatpush1.bf16.msra.mxu0 %v1111
        %1167 = vmatprep.subr.bf16.mxu0 0
        %1168 = vmatpush1.bf16.msra.mxu0 %v1112
        %1169 = vmatprep.subr.bf16.mxu0 0
        %1170 = vmatpush1.bf16.msra.mxu0 %v1113
        %1171 = vmatprep.subr.bf16.mxu0 0
        %1172 = vmatpush1.bf16.msra.mxu0 %v1114
        %1173 = vmatprep.subr.bf16.mxu0 0
        %1174 = vmatpush1.bf16.msra.mxu0 %v1115
        %1175 = vmatprep.subr.bf16.mxu0 0
        %1176 = vmatpush1.bf16.msra.mxu0 %v1116
        %1177 = vmatprep.subr.bf16.mxu0 0
        %1178 = vmatpush1.bf16.msra.mxu0 %v1117
        %1179 = vmatprep.subr.bf16.mxu0 0
        %1180 = vmatpush1.bf16.msra.mxu0 %v1118
        %1181 = vmatprep.subr.bf16.mxu0 0
        %1182 = vmatpush1.bf16.msra.mxu0 %v1119
        %1183 = vmatprep.subr.bf16.mxu0 0
        %1184 = vmatpush1.bf16.msra.mxu0 %v1120
        %1185 = vmatprep.mubr.bf16.mxu0 %v902
        %1186 = vmatmul.mubr.bf16.gmra.mrb[0].mxu0 %v896
        %v1187 = vpop.f32.mrb[0].mxu0
        %v1188 = vadd.f32 0.0, %v1187
        %v1189 = vpop.f32.mrb[0].mxu0
        %v1190 = vpop.f32.mrb[0].mxu0
        %v1191 = vadd.f32 0.0, %v1190
        %v1192 = vpop.f32.mrb[0].mxu0
        %1193 = vmatprep.mubr.bf16.mxu0 %v903
        %1194 = vmatmul.mubr.bf16.gmra.mrb[0].mxu0 %v897
        %v1195 = vpop.f32.mrb[0].mxu0
        %v1196 = vadd.f32 0.0, %v1195
        %v1197 = vpop.f32.mrb[0].mxu0
        %v1198 = vpop.f32.mrb[0].mxu0
        %v1199 = vadd.f32 0.0, %v1198
        %v1200 = vpop.f32.mrb[0].mxu0
        %1201 = vmatprep.mubr.bf16.mxu0 %v904
        %1202 = vmatmul.mubr.bf16.gmra.mrb[0].mxu0 %v898
        %v1203 = vpop.f32.mrb[0].mxu0
        %v1204 = vadd.f32 0.0, %v1203
        %v1205 = vpop.f32.mrb[0].mxu0
        %v1206 = vpop.f32.mrb[0].mxu0
        %v1207 = vadd.f32 0.0, %v1206
        %v1208 = vpop.f32.mrb[0].mxu0
        %1209 = vmatprep.mubr.bf16.mxu0 %v905
        %1210 = vmatmul.mubr.bf16.gmra.mrb[0].mxu0 %v899
        %v1211 = vpop.f32.mrb[0].mxu0
        %v1212 = vadd.f32 0.0, %v1211
        %v1213 = vpop.f32.mrb[0].mxu0
        %v1214 = vpop.f32.mrb[0].mxu0
        %v1215 = vadd.f32 0.0, %v1214
        %v1216 = vpop.f32.mrb[0].mxu0
        %1217 = vdwg.mxu0
        %1218 = vmatprep.subr.bf16.mxu0 0
        %1219 = vmatpush1.bf16.msra.mxu0 %v1121
        %1220 = vmatprep.subr.bf16.mxu0 0
        %1221 = vmatpush1.bf16.msra.mxu0 %v1122
        %1222 = vmatprep.subr.bf16.mxu0 0
        %1223 = vmatpush1.bf16.msra.mxu0 %v1123
        %1224 = vmatprep.subr.bf16.mxu0 0
        %1225 = vmatpush1.bf16.msra.mxu0 %v1124
        %1226 = vmatprep.subr.bf16.mxu0 0
        %1227 = vmatpush1.bf16.msra.mxu0 %v1125
        %1228 = vmatprep.subr.bf16.mxu0 0
        %1229 = vmatpush1.bf16.msra.mxu0 %v1126
        %1230 = vmatprep.subr.bf16.mxu0 0
        %1231 = vmatpush1.bf16.msra.mxu0 %v1127
        %1232 = vmatprep.subr.bf16.mxu0 0
        %1233 = vmatpush1.bf16.msra.mxu0 %v1128
        %1234 = vmatprep.subr.bf16.mxu0 0
        %1235 = vmatpush1.bf16.msra.mxu0 0
        %1236 = vmatprep.subr.bf16.mxu0 0
        %1237 = vmatpush1.bf16.msra.mxu0 0
        %1238 = vmatprep.subr.bf16.mxu0 0
        %1239 = vmatpush1.bf16.msra.mxu0 0
        %1240 = vmatprep.subr.bf16.mxu0 0
        %1241 = vmatpush1.bf16.msra.mxu0 0
        %1242 = vmatprep.subr.bf16.mxu0 0
        %1243 = vmatpush1.bf16.msra.mxu0 0
        %1244 = vmatprep.subr.bf16.mxu0 0
        %1245 = vmatpush1.bf16.msra.mxu0 0
        %1246 = vmatprep.subr.bf16.mxu0 0
        %1247 = vmatpush1.bf16.msra.mxu0 0
        %1248 = vmatprep.subr.bf16.mxu0 0
        %1249 = vmatpush1.bf16.msra.mxu0 0
        %1250 = vmatprep.mubr.bf16.mxu0 0
        %1251 = vmatmul.mubr.bf16.gmra.mrb[0].mxu0 %v908
        %v1252 = vpop.f32.mrb[0].mxu0
        %v1253 = vadd.f32 %v1188, %v1252
        %v1254 = vpop.f32.mrb[0].mxu0
        %v1255 = vpop.f32.mrb[0].mxu0
        %v1256 = vadd.f32 %v1191, %v1255
        %v1257 = vpop.f32.mrb[0].mxu0
        %1258 = vmatprep.mubr.bf16.mxu0 0
        %1259 = vmatmul.mubr.bf16.gmra.mrb[0].mxu0 %v909
        %v1260 = vpop.f32.mrb[0].mxu0
        %v1261 = vadd.f32 %v1196, %v1260
        %v1262 = vpop.f32.mrb[0].mxu0
        %v1263 = vpop.f32.mrb[0].mxu0
        %v1264 = vadd.f32 %v1199, %v1263
        %v1265 = vpop.f32.mrb[0].mxu0
        %1266 = vmatprep.mubr.bf16.mxu0 0
        %1267 = vmatmul.mubr.bf16.gmra.mrb[0].mxu0 %v910
        %v1268 = vpop.f32.mrb[0].mxu0
        %v1269 = vadd.f32 %v1204, %v1268
        %v1270 = vpop.f32.mrb[0].mxu0
        %v1271 = vpop.f32.mrb[0].mxu0
        %v1272 = vadd.f32 %v1207, %v1271
        %v1273 = vpop.f32.mrb[0].mxu0
        %1274 = vmatprep.mubr.bf16.mxu0 0
        %1275 = vmatmul.mubr.bf16.gmra.mrb[0].mxu0 %v911
        %v1276 = vpop.f32.mrb[0].mxu0
        %v1277 = vadd.f32 %v1212, %v1276
        %v1278 = vpop.f32.mrb[0].mxu0
        %v1279 = vpop.f32.mrb[0].mxu0
        %v1280 = vadd.f32 %v1215, %v1279
        %v1281 = vpop.f32.mrb[0].mxu0
        %1282 = vdwg.mxu0
        %v1331 = vunpack.c.l.b16 %v913
        %v1332 = vunpack.c.l.b16 %v914
        %v1333 = vunpack.c.l.b16 %v915
        %v1334 = vunpack.c.l.b16 %v916
        %v1335 = vunpack.c.l.b16 %v917
        %v1336 = vunpack.c.l.b16 %v918
        %v1337 = vunpack.c.l.b16 %v919
        %v1338 = vunpack.c.l.b16 %v920
        %v1339 = vunpack.c.l.b16 %v921
        %v1340 = vunpack.c.l.b16 %v922
        %v1341 = vunpack.c.l.b16 %v923
        %v1342 = vunpack.c.l.b16 %v924
        %v1343 = vunpack.c.l.b16 %v925
        %v1344 = vunpack.c.l.b16 %v926
        %v1345 = vunpack.c.l.b16 %v927
        %v1346 = vunpack.c.l.b16 %v928
        %v1347 = vunpack.c.l.b16 %v929
        %v1348 = vunpack.c.l.b16 %v930
        %v1349 = vunpack.c.l.b16 %v931
        %v1350 = vunpack.c.l.b16 %v932
        %v1351 = vunpack.c.l.b16 %v933
        %v1352 = vunpack.c.l.b16 %v934
        %v1353 = vunpack.c.l.b16 %v935
        %v1354 = vunpack.c.l.b16 %v936
        %v1355 = vunpack.c.l.b16 %v937
        %v1356 = vunpack.c.l.b16 %v938
        %v1357 = vunpack.c.l.b16 %v939
        %v1358 = vunpack.c.l.b16 %v940
        %v1359 = vunpack.c.l.b16 %v941
        %v1360 = vunpack.c.l.b16 %v942
        %v1361 = vunpack.c.l.b16 %v943
        %v1362 = vunpack.c.l.b16 %v944
        %v1363 = vunpack.c.l.b16 %v945
        %v1364 = vunpack.c.l.b16 %v946
        %v1365 = vunpack.c.l.b16 %v947
        %v1366 = vunpack.c.l.b16 %v948
        %v1367 = vunpack.c.l.b16 %v949
        %v1368 = vunpack.c.l.b16 %v950
        %v1369 = vunpack.c.l.b16 %v951
        %v1370 = vunpack.c.l.b16 %v952
        %v1371 = vunpack.c.l.b16 %v953
        %v1372 = vunpack.c.l.b16 %v954
        %v1373 = vunpack.c.l.b16 %v955
        %v1374 = vunpack.c.l.b16 %v956
        %v1375 = vunpack.c.l.b16 %v957
        %v1376 = vunpack.c.l.b16 %v958
        %v1377 = vunpack.c.l.b16 %v959
        %v1378 = vunpack.c.l.b16 %v960
        %v1379 = vpack.c.b16 %v1332, %v1331
        %v1380 = vpack.c.b16 %v1334, %v1333
        %v1381 = vpack.c.b16 %v1336, %v1335
        %v1382 = vpack.c.b16 %v1338, %v1337
        %v1383 = vpack.c.b16 %v1340, %v1339
        %v1384 = vpack.c.b16 %v1342, %v1341
        %v1385 = vpack.c.b16 %v1344, %v1343
        %v1386 = vpack.c.b16 %v1346, %v1345
        %v1387 = vpack.c.b16 %v1348, %v1347
        %v1388 = vpack.c.b16 %v1350, %v1349
        %v1389 = vpack.c.b16 %v1352, %v1351
        %v1390 = vpack.c.b16 %v1354, %v1353
        %v1391 = vpack.c.b16 %v1356, %v1355
        %v1392 = vpack.c.b16 %v1358, %v1357
        %v1393 = vpack.c.b16 %v1360, %v1359
        %v1394 = vpack.c.b16 %v1362, %v1361
        %v1395 = vpack.c.b16 %v1364, %v1363
        %v1396 = vpack.c.b16 %v1366, %v1365
        %v1397 = vpack.c.b16 %v1368, %v1367
        %v1398 = vpack.c.b16 %v1370, %v1369
        %v1399 = vpack.c.b16 %v1372, %v1371
        %v1400 = vpack.c.b16 %v1374, %v1373
        %v1401 = vpack.c.b16 %v1376, %v1375
        %v1402 = vpack.c.b16 %v1378, %v1377
        %1427 = vmatprep.subr.bf16.mxu0 0
        %1428 = vmatpush1.bf16.msra.mxu0 %v1379
        %1429 = vmatprep.subr.bf16.mxu0 0
        %1430 = vmatpush1.bf16.msra.mxu0 %v1380
        %1431 = vmatprep.subr.bf16.mxu0 0
        %1432 = vmatpush1.bf16.msra.mxu0 %v1381
        %1433 = vmatprep.subr.bf16.mxu0 0
        %1434 = vmatpush1.bf16.msra.mxu0 %v1382
        %1435 = vmatprep.subr.bf16.mxu0 0
        %1436 = vmatpush1.bf16.msra.mxu0 %v1383
        %1437 = vmatprep.subr.bf16.mxu0 0
        %1438 = vmatpush1.bf16.msra.mxu0 %v1384
        %1439 = vmatprep.subr.bf16.mxu0 0
        %1440 = vmatpush1.bf16.msra.mxu0 %v1385
        %1441 = vmatprep.subr.bf16.mxu0 0
        %1442 = vmatpush1.bf16.msra.mxu0 %v1386
        %1443 = vmatprep.subr.bf16.mxu0 0
        %1444 = vmatpush1.bf16.msra.mxu0 %v1387
        %1445 = vmatprep.subr.bf16.mxu0 0
        %1446 = vmatpush1.bf16.msra.mxu0 %v1388
        %1447 = vmatprep.subr.bf16.mxu0 0
        %1448 = vmatpush1.bf16.msra.mxu0 %v1389
        %1449 = vmatprep.subr.bf16.mxu0 0
        %1450 = vmatpush1.bf16.msra.mxu0 %v1390
        %1451 = vmatprep.subr.bf16.mxu0 0
        %1452 = vmatpush1.bf16.msra.mxu0 %v1391
        %1453 = vmatprep.subr.bf16.mxu0 0
        %1454 = vmatpush1.bf16.msra.mxu0 %v1392
        %1455 = vmatprep.subr.bf16.mxu0 0
        %1456 = vmatpush1.bf16.msra.mxu0 %v1393
        %1457 = vmatprep.subr.bf16.mxu0 0
        %1458 = vmatpush1.bf16.msra.mxu0 %v1394
        %1459 = vmatprep.mubr.bf16.mxu0 %v901
        %1460 = vmatmul.mubr.bf16.gmra.mrb[0].mxu0 %v895
        %v1461 = vpop.f32.mrb[0].mxu0
        %v1462 = vadd.f32 %v1253, %v1461
        %v1463 = vpop.f32.mrb[0].mxu0
        %v1464 = vpop.f32.mrb[0].mxu0
        %v1465 = vadd.f32 %v1256, %v1464
        %v1466 = vpop.f32.mrb[0].mxu0
        %1467 = vmatprep.mubr.bf16.mxu0 %v902
        %1468 = vmatmul.mubr.bf16.gmra.mrb[0].mxu0 %v896
        %v1469 = vpop.f32.mrb[0].mxu0
        %v1470 = vadd.f32 %v1261, %v1469
        %v1471 = vpop.f32.mrb[0].mxu0
        %v1472 = vpop.f32.mrb[0].mxu0
        %v1473 = vadd.f32 %v1264, %v1472
        %v1474 = vpop.f32.mrb[0].mxu0
        %1475 = vmatprep.mubr.bf16.mxu0 %v903
        %1476 = vmatmul.mubr.bf16.gmra.mrb[0].mxu0 %v897
        %v1477 = vpop.f32.mrb[0].mxu0
        %v1478 = vadd.f32 %v1269, %v1477
        %v1479 = vpop.f32.mrb[0].mxu0
        %v1480 = vpop.f32.mrb[0].mxu0
        %v1481 = vadd.f32 %v1272, %v1480
        %v1482 = vpop.f32.mrb[0].mxu0
        %1483 = vmatprep.mubr.bf16.mxu0 %v904
        %1484 = vmatmul.mubr.bf16.gmra.mrb[0].mxu0 %v898
        %v1485 = vpop.f32.mrb[0].mxu0
        %v1486 = vadd.f32 %v1277, %v1485
        %v1487 = vpop.f32.mrb[0].mxu0
        %v1488 = vpop.f32.mrb[0].mxu0
        %v1489 = vadd.f32 %v1280, %v1488
        %v1490 = vpop.f32.mrb[0].mxu0
        %1491 = vdwg.mxu0
        %1492 = vmatprep.subr.bf16.mxu0 0
        %1493 = vmatpush1.bf16.msra.mxu0 %v1395
        %1494 = vmatprep.subr.bf16.mxu0 0
        %1495 = vmatpush1.bf16.msra.mxu0 %v1396
        %1496 = vmatprep.subr.bf16.mxu0 0
        %1497 = vmatpush1.bf16.msra.mxu0 %v1397
        %1498 = vmatprep.subr.bf16.mxu0 0
        %1499 = vmatpush1.bf16.msra.mxu0 %v1398
        %1500 = vmatprep.subr.bf16.mxu0 0
        %1501 = vmatpush1.bf16.msra.mxu0 %v1399
        %1502 = vmatprep.subr.bf16.mxu0 0
        %1503 = vmatpush1.bf16.msra.mxu0 %v1400
        %1504 = vmatprep.subr.bf16.mxu0 0
        %1505 = vmatpush1.bf16.msra.mxu0 %v1401
        %1506 = vmatprep.subr.bf16.mxu0 0
        %1507 = vmatpush1.bf16.msra.mxu0 %v1402
        %1508 = vmatprep.subr.bf16.mxu0 0
        %1509 = vmatpush1.bf16.msra.mxu0 0
        %1510 = vmatprep.subr.bf16.mxu0 0
        %1511 = vmatpush1.bf16.msra.mxu0 0
        %1512 = vmatprep.subr.bf16.mxu0 0
        %1513 = vmatpush1.bf16.msra.mxu0 0
        %1514 = vmatprep.subr.bf16.mxu0 0
        %1515 = vmatpush1.bf16.msra.mxu0 0
        %1516 = vmatprep.subr.bf16.mxu0 0
        %1517 = vmatpush1.bf16.msra.mxu0 0
        %1518 = vmatprep.subr.bf16.mxu0 0
        %1519 = vmatpush1.bf16.msra.mxu0 0
        %1520 = vmatprep.subr.bf16.mxu0 0
        %1521 = vmatpush1.bf16.msra.mxu0 0
        %1522 = vmatprep.subr.bf16.mxu0 0
        %1523 = vmatpush1.bf16.msra.mxu0 0
        %1524 = vmatprep.mubr.bf16.mxu0 0
        %1525 = vmatmul.mubr.bf16.gmra.mrb[0].mxu0 %v907
        %v1526 = vpop.f32.mrb[0].mxu0
        %v1527 = vadd.f32 %v1462, %v1526
        %v1528 = vpop.f32.mrb[0].mxu0
        %v1529 = vpop.f32.mrb[0].mxu0
        %v1530 = vadd.f32 %v1465, %v1529
        %v1531 = vpop.f32.mrb[0].mxu0
        %1532 = vmatprep.mubr.bf16.mxu0 0
        %1533 = vmatmul.mubr.bf16.gmra.mrb[0].mxu0 %v908
        %v1534 = vpop.f32.mrb[0].mxu0
        %v1535 = vadd.f32 %v1470, %v1534
        %v1536 = vpop.f32.mrb[0].mxu0
        %v1537 = vpop.f32.mrb[0].mxu0
        %v1538 = vadd.f32 %v1473, %v1537
        %v1539 = vpop.f32.mrb[0].mxu0
        %1540 = vmatprep.mubr.bf16.mxu0 0
        %1541 = vmatmul.mubr.bf16.gmra.mrb[0].mxu0 %v909
        %v1542 = vpop.f32.mrb[0].mxu0
        %v1543 = vadd.f32 %v1478, %v1542
        %v1544 = vpop.f32.mrb[0].mxu0
        %v1545 = vpop.f32.mrb[0].mxu0
        %v1546 = vadd.f32 %v1481, %v1545
        %v1547 = vpop.f32.mrb[0].mxu0
        %1548 = vmatprep.mubr.bf16.mxu0 0
        %1549 = vmatmul.mubr.bf16.gmra.mrb[0].mxu0 %v910
        %v1550 = vpop.f32.mrb[0].mxu0
        %v1551 = vadd.f32 %v1486, %v1550
        %v1552 = vpop.f32.mrb[0].mxu0
        %v1553 = vpop.f32.mrb[0].mxu0
        %v1554 = vadd.f32 %v1489, %v1553
        %v1555 = vpop.f32.mrb[0].mxu0
        %1556 = vdwg.mxu0
        %v1557 = vld [vmem:[%s5 + $0x180] sm:$0xf]
        %v1558 = vld [vmem:[%s5 + $0x184] sm:$0xf]
        %v1559 = vld [vmem:[%s5 + $0x188] sm:$0xf]
        %v1560 = vld [vmem:[%s5 + $0x18c] sm:$0xf]
        %v1561 = vld [vmem:[%s5 + $0x190] sm:$0xf]
        %v1562 = vld [vmem:[%s5 + $0x194] sm:$0xf]
        %v1563 = vld [vmem:[%s5 + $0x198] sm:$0xf]
        %v1564 = vld [vmem:[%s5 + $0x19c] sm:$0xf]
        %v1565 = vld [vmem:[%s5 + $0x1a0] sm:$0xf]
        %v1566 = vld [vmem:[%s5 + $0x1a4] sm:$0xf]
        %v1567 = vld [vmem:[%s5 + $0x1a8] sm:$0xf]
        %v1568 = vld [vmem:[%s5 + $0x1ac] sm:$0xf]
        %v1569 = vld [vmem:[%s5 + $0x1b0] sm:$0xf]
        %v1570 = vld [vmem:[%s5 + $0x1b4] sm:$0xf]
        %v1571 = vld [vmem:[%s5 + $0x1b8] sm:$0xf]
        %v1572 = vld [vmem:[%s5 + $0x1bc] sm:$0xf]
        %v1573 = vld [vmem:[%s5 + $0x1c0] sm:$0xf]
        %v1574 = vld [vmem:[%s5 + $0x1c4] sm:$0xf]
        %v1575 = vld [vmem:[%s5 + $0x1c8] sm:$0xf]
        %v1576 = vld [vmem:[%s5 + $0x1cc] sm:$0xf]
        %v1577 = vld [vmem:[%s5 + $0x1d0] sm:$0xf]
        %v1578 = vld [vmem:[%s5 + $0x1d4] sm:$0xf]
        %v1579 = vld [vmem:[%s5 + $0x1d8] sm:$0xf]
        %v1580 = vld [vmem:[%s5 + $0x1dc] sm:$0xf]
        %v1581 = vld [vmem:[%s5 + $0x1e0] sm:$0xf]
        %v1582 = vld [vmem:[%s5 + $0x1e4] sm:$0xf]
        %v1583 = vld [vmem:[%s5 + $0x1e8] sm:$0xf]
        %v1584 = vld [vmem:[%s5 + $0x1ec] sm:$0xf]
        %v1585 = vld [vmem:[%s5 + $0x1f0] sm:$0xf]
        %v1586 = vld [vmem:[%s5 + $0x1f4] sm:$0xf]
        %v1587 = vld [vmem:[%s5 + $0x1f8] sm:$0xf]
        %v1588 = vld [vmem:[%s5 + $0x1fc] sm:$0xf]
        %v1589 = vld [vmem:[%s5 + $0x200] sm:$0xf]
        %v1590 = vld [vmem:[%s5 + $0x204] sm:$0xf]
        %v1591 = vld [vmem:[%s5 + $0x208] sm:$0xf]
        %v1592 = vld [vmem:[%s5 + $0x20c] sm:$0xf]
        %v1593 = vld [vmem:[%s5 + $0x210] sm:$0xf]
        %v1594 = vld [vmem:[%s5 + $0x214] sm:$0xf]
        %v1595 = vld [vmem:[%s5 + $0x218] sm:$0xf]
        %v1596 = vld [vmem:[%s5 + $0x21c] sm:$0xf]
        %v1597 = vld [vmem:[%s5 + $0x220] sm:$0xf]
        %v1598 = vld [vmem:[%s5 + $0x224] sm:$0xf]
        %v1599 = vld [vmem:[%s5 + $0x228] sm:$0xf]
        %v1600 = vld [vmem:[%s5 + $0x22c] sm:$0xf]
        %v1601 = vld [vmem:[%s5 + $0x230] sm:$0xf]
        %v1602 = vld [vmem:[%s5 + $0x234] sm:$0xf]
        %v1603 = vld [vmem:[%s5 + $0x238] sm:$0xf]
        %v1604 = vld [vmem:[%s5 + $0x23c] sm:$0xf]
        %v1653 = vunpack.c.l.b16 %v1557
        %v1654 = vunpack.c.l.b16 %v1558
        %v1655 = vunpack.c.l.b16 %v1559
        %v1656 = vunpack.c.l.b16 %v1560
        %v1657 = vunpack.c.l.b16 %v1561
        %v1658 = vunpack.c.l.b16 %v1562
        %v1659 = vunpack.c.l.b16 %v1563
        %v1660 = vunpack.c.l.b16 %v1564
        %v1661 = vunpack.c.l.b16 %v1565
        %v1662 = vunpack.c.l.b16 %v1566
        %v1663 = vunpack.c.l.b16 %v1567
        %v1664 = vunpack.c.l.b16 %v1568
        %v1665 = vunpack.c.l.b16 %v1569
        %v1666 = vunpack.c.l.b16 %v1570
        %v1667 = vunpack.c.l.b16 %v1571
        %v1668 = vunpack.c.l.b16 %v1572
        %v1669 = vunpack.c.l.b16 %v1573
        %v1670 = vunpack.c.l.b16 %v1574
        %v1671 = vunpack.c.l.b16 %v1575
        %v1672 = vunpack.c.l.b16 %v1576
        %v1673 = vunpack.c.l.b16 %v1577
        %v1674 = vunpack.c.l.b16 %v1578
        %v1675 = vunpack.c.l.b16 %v1579
        %v1676 = vunpack.c.l.b16 %v1580
        %v1677 = vunpack.c.l.b16 %v1581
        %v1678 = vunpack.c.l.b16 %v1582
        %v1679 = vunpack.c.l.b16 %v1583
        %v1680 = vunpack.c.l.b16 %v1584
        %v1681 = vunpack.c.l.b16 %v1585
        %v1682 = vunpack.c.l.b16 %v1586
        %v1683 = vunpack.c.l.b16 %v1587
        %v1684 = vunpack.c.l.b16 %v1588
        %v1685 = vunpack.c.l.b16 %v1589
        %v1686 = vunpack.c.l.b16 %v1590
        %v1687 = vunpack.c.l.b16 %v1591
        %v1688 = vunpack.c.l.b16 %v1592
        %v1689 = vunpack.c.l.b16 %v1593
        %v1690 = vunpack.c.l.b16 %v1594
        %v1691 = vunpack.c.l.b16 %v1595
        %v1692 = vunpack.c.l.b16 %v1596
        %v1693 = vunpack.c.l.b16 %v1597
        %v1694 = vunpack.c.l.b16 %v1598
        %v1695 = vunpack.c.l.b16 %v1599
        %v1696 = vunpack.c.l.b16 %v1600
        %v1697 = vunpack.c.l.b16 %v1601
        %v1698 = vunpack.c.l.b16 %v1602
        %v1699 = vunpack.c.l.b16 %v1603
        %v1700 = vunpack.c.l.b16 %v1604
        %v1701 = vpack.c.b16 %v1654, %v1653
        %v1702 = vpack.c.b16 %v1656, %v1655
        %v1703 = vpack.c.b16 %v1658, %v1657
        %v1704 = vpack.c.b16 %v1660, %v1659
        %v1705 = vpack.c.b16 %v1662, %v1661
        %v1706 = vpack.c.b16 %v1664, %v1663
        %v1707 = vpack.c.b16 %v1666, %v1665
        %v1708 = vpack.c.b16 %v1668, %v1667
        %v1709 = vpack.c.b16 %v1670, %v1669
        %v1710 = vpack.c.b16 %v1672, %v1671
        %v1711 = vpack.c.b16 %v1674, %v1673
        %v1712 = vpack.c.b16 %v1676, %v1675
        %v1713 = vpack.c.b16 %v1678, %v1677
        %v1714 = vpack.c.b16 %v1680, %v1679
        %v1715 = vpack.c.b16 %v1682, %v1681
        %v1716 = vpack.c.b16 %v1684, %v1683
        %v1717 = vpack.c.b16 %v1686, %v1685
        %v1718 = vpack.c.b16 %v1688, %v1687
        %v1719 = vpack.c.b16 %v1690, %v1689
        %v1720 = vpack.c.b16 %v1692, %v1691
        %v1721 = vpack.c.b16 %v1694, %v1693
        %v1722 = vpack.c.b16 %v1696, %v1695
        %v1723 = vpack.c.b16 %v1698, %v1697
        %v1724 = vpack.c.b16 %v1700, %v1699
        %1749 = vmatprep.subr.bf16.mxu0 0
        %1750 = vmatpush1.bf16.msra.mxu0 %v1701
        %1751 = vmatprep.subr.bf16.mxu0 0
        %1752 = vmatpush1.bf16.msra.mxu0 %v1702
        %1753 = vmatprep.subr.bf16.mxu0 0
        %1754 = vmatpush1.bf16.msra.mxu0 %v1703
        %1755 = vmatprep.subr.bf16.mxu0 0
        %1756 = vmatpush1.bf16.msra.mxu0 %v1704
        %1757 = vmatprep.subr.bf16.mxu0 0
        %1758 = vmatpush1.bf16.msra.mxu0 %v1705
        %1759 = vmatprep.subr.bf16.mxu0 0
        %1760 = vmatpush1.bf16.msra.mxu0 %v1706
        %1761 = vmatprep.subr.bf16.mxu0 0
        %1762 = vmatpush1.bf16.msra.mxu0 %v1707
        %1763 = vmatprep.subr.bf16.mxu0 0
        %1764 = vmatpush1.bf16.msra.mxu0 %v1708
        %1765 = vmatprep.subr.bf16.mxu0 0
        %1766 = vmatpush1.bf16.msra.mxu0 %v1709
        %1767 = vmatprep.subr.bf16.mxu0 0
        %1768 = vmatpush1.bf16.msra.mxu0 %v1710
        %1769 = vmatprep.subr.bf16.mxu0 0
        %1770 = vmatpush1.bf16.msra.mxu0 %v1711
        %1771 = vmatprep.subr.bf16.mxu0 0
        %1772 = vmatpush1.bf16.msra.mxu0 %v1712
        %1773 = vmatprep.subr.bf16.mxu0 0
        %1774 = vmatpush1.bf16.msra.mxu0 %v1713
        %1775 = vmatprep.subr.bf16.mxu0 0
        %1776 = vmatpush1.bf16.msra.mxu0 %v1714
        %1777 = vmatprep.subr.bf16.mxu0 0
        %1778 = vmatpush1.bf16.msra.mxu0 %v1715
        %1779 = vmatprep.subr.bf16.mxu0 0
        %1780 = vmatpush1.bf16.msra.mxu0 %v1716
        %1781 = vmatprep.mubr.bf16.mxu0 %v903
        %1782 = vmatmul.mubr.bf16.gmra.mrb[0].mxu0 %v897
        %v1783 = vpop.f32.mrb[0].mxu0
        %v1784 = vadd.f32 0.0, %v1783
        %v1785 = vpop.f32.mrb[0].mxu0
        %v1786 = vpop.f32.mrb[0].mxu0
        %v1787 = vadd.f32 0.0, %v1786
        %v1788 = vpop.f32.mrb[0].mxu0
        %1789 = vmatprep.mubr.bf16.mxu0 %v904
        %1790 = vmatmul.mubr.bf16.gmra.mrb[0].mxu0 %v898
        %v1791 = vpop.f32.mrb[0].mxu0
        %v1792 = vadd.f32 0.0, %v1791
        %v1793 = vpop.f32.mrb[0].mxu0
        %v1794 = vpop.f32.mrb[0].mxu0
        %v1795 = vadd.f32 0.0, %v1794
        %v1796 = vpop.f32.mrb[0].mxu0
        %1797 = vmatprep.mubr.bf16.mxu0 %v905
        %1798 = vmatmul.mubr.bf16.gmra.mrb[0].mxu0 %v899
        %v1799 = vpop.f32.mrb[0].mxu0
        %v1800 = vadd.f32 0.0, %v1799
        %v1801 = vpop.f32.mrb[0].mxu0
        %v1802 = vpop.f32.mrb[0].mxu0
        %v1803 = vadd.f32 0.0, %v1802
        %v1804 = vpop.f32.mrb[0].mxu0
        %1805 = vmatprep.mubr.bf16.mxu0 %v906
        %1806 = vmatmul.mubr.bf16.gmra.mrb[0].mxu0 %v900
        %v1807 = vpop.f32.mrb[0].mxu0
        %v1808 = vadd.f32 0.0, %v1807
        %v1809 = vpop.f32.mrb[0].mxu0
        %v1810 = vpop.f32.mrb[0].mxu0
        %v1811 = vadd.f32 0.0, %v1810
        %v1812 = vpop.f32.mrb[0].mxu0
        %1813 = vdwg.mxu0
        %1814 = vmatprep.subr.bf16.mxu0 0
        %1815 = vmatpush1.bf16.msra.mxu0 %v1717
        %1816 = vmatprep.subr.bf16.mxu0 0
        %1817 = vmatpush1.bf16.msra.mxu0 %v1718
        %1818 = vmatprep.subr.bf16.mxu0 0
        %1819 = vmatpush1.bf16.msra.mxu0 %v1719
        %1820 = vmatprep.subr.bf16.mxu0 0
        %1821 = vmatpush1.bf16.msra.mxu0 %v1720
        %1822 = vmatprep.subr.bf16.mxu0 0
        %1823 = vmatpush1.bf16.msra.mxu0 %v1721
        %1824 = vmatprep.subr.bf16.mxu0 0
        %1825 = vmatpush1.bf16.msra.mxu0 %v1722
        %1826 = vmatprep.subr.bf16.mxu0 0
        %1827 = vmatpush1.bf16.msra.mxu0 %v1723
        %1828 = vmatprep.subr.bf16.mxu0 0
        %1829 = vmatpush1.bf16.msra.mxu0 %v1724
        %1830 = vmatprep.subr.bf16.mxu0 0
        %1831 = vmatpush1.bf16.msra.mxu0 0
        %1832 = vmatprep.subr.bf16.mxu0 0
        %1833 = vmatpush1.bf16.msra.mxu0 0
        %1834 = vmatprep.subr.bf16.mxu0 0
        %1835 = vmatpush1.bf16.msra.mxu0 0
        %1836 = vmatprep.subr.bf16.mxu0 0
        %1837 = vmatpush1.bf16.msra.mxu0 0
        %1838 = vmatprep.subr.bf16.mxu0 0
        %1839 = vmatpush1.bf16.msra.mxu0 0
        %1840 = vmatprep.subr.bf16.mxu0 0
        %1841 = vmatpush1.bf16.msra.mxu0 0
        %1842 = vmatprep.subr.bf16.mxu0 0
        %1843 = vmatpush1.bf16.msra.mxu0 0
        %1844 = vmatprep.subr.bf16.mxu0 0
        %1845 = vmatpush1.bf16.msra.mxu0 0
        %1846 = vmatprep.mubr.bf16.mxu0 0
        %1847 = vmatmul.mubr.bf16.gmra.mrb[0].mxu0 %v909
        %v1848 = vpop.f32.mrb[0].mxu0
        %v1849 = vadd.f32 %v1784, %v1848
        %v1850 = vpop.f32.mrb[0].mxu0
        %v1851 = vpop.f32.mrb[0].mxu0
        %v1852 = vadd.f32 %v1787, %v1851
        %v1853 = vpop.f32.mrb[0].mxu0
        %1854 = vmatprep.mubr.bf16.mxu0 0
        %1855 = vmatmul.mubr.bf16.gmra.mrb[0].mxu0 %v910
        %v1856 = vpop.f32.mrb[0].mxu0
        %v1857 = vadd.f32 %v1792, %v1856
        %v1858 = vpop.f32.mrb[0].mxu0
        %v1859 = vpop.f32.mrb[0].mxu0
        %v1860 = vadd.f32 %v1795, %v1859
        %v1861 = vpop.f32.mrb[0].mxu0
        %1862 = vmatprep.mubr.bf16.mxu0 0
        %1863 = vmatmul.mubr.bf16.gmra.mrb[0].mxu0 %v911
        %v1864 = vpop.f32.mrb[0].mxu0
        %v1865 = vadd.f32 %v1800, %v1864
        %v1866 = vpop.f32.mrb[0].mxu0
        %v1867 = vpop.f32.mrb[0].mxu0
        %v1868 = vadd.f32 %v1803, %v1867
        %v1869 = vpop.f32.mrb[0].mxu0
        %1870 = vmatprep.mubr.bf16.mxu0 0
        %1871 = vmatmul.mubr.bf16.gmra.mrb[0].mxu0 %v912
        %v1872 = vpop.f32.mrb[0].mxu0
        %v1873 = vadd.f32 %v1808, %v1872
        %v1874 = vpop.f32.mrb[0].mxu0
        %v1875 = vpop.f32.mrb[0].mxu0
        %v1876 = vadd.f32 %v1811, %v1875
        %v1877 = vpop.f32.mrb[0].mxu0
        %1878 = vdwg.mxu0
        %v1879 = vadd.f32 %v1527, %v1849
        %v1880 = vadd.f32 %v1530, %v1852
        %v1881 = vadd.f32 %v1535, %v1857
        %v1882 = vadd.f32 %v1538, %v1860
        %v1883 = vadd.f32 %v1543, %v1865
        %v1884 = vadd.f32 %v1546, %v1868
        %v1885 = vadd.f32 %v1551, %v1873
        %v1886 = vadd.f32 %v1554, %v1876
        %v1887 = vld [vmem:[%s6] sm:$0x1]
        %v1889 = vlaneseq
        %v1890 = vshrl.u32 %v1889, 7
        %v1891 = vsub.s32 0, %v1890
        %v1892 = vrot.slane %v1887, %v1891
        %v1894 = vadd.f32 %v1879, %v1892
        %v1895 = vadd.f32 %v1880, %v1892
        %v1896 = vadd.f32 %v1881, %v1892
        %v1897 = vadd.f32 %v1882, %v1892
        %v1898 = vadd.f32 %v1883, %v1892
        %v1899 = vadd.f32 %v1884, %v1892
        %v1900 = vadd.f32 %v1885, %v1892
        %v1901 = vadd.f32 %v1886, %v1892
        %v1902 = vmax.f32 %v1894, 0.0
        %v1903 = vmax.f32 %v1895, 0.0
        %v1904 = vmax.f32 %v1896, 0.0
        %v1905 = vmax.f32 %v1897, 0.0
        %v1906 = vmax.f32 %v1898, 0.0
        %v1907 = vmax.f32 %v1899, 0.0
        %v1908 = vmax.f32 %v1900, 0.0
        %v1909 = vmax.f32 %v1901, 0.0
        %v1910 = vpack.c.bf16 %v1903, %v1902
        %v1911 = vpack.c.bf16 %v1905, %v1904
        %v1912 = vpack.c.bf16 %v1907, %v1906
        %v1913 = vpack.c.bf16 %v1909, %v1908
        %v1914 = vld [vmem:[%s7] sm:$0xf]
        %v1915 = vld [vmem:[%s7 + $0x4] sm:$0xf]
        %v1916 = vld [vmem:[%s7 + $0x8] sm:$0xf]
        %v1917 = vld [vmem:[%s7 + $0xc] sm:$0xf]
        %v1918 = vld [vmem:[%s7 + $0x10] sm:$0xf]
        %v1919 = vld [vmem:[%s7 + $0x14] sm:$0xf]
        %v1920 = vld [vmem:[%s7 + $0x18] sm:$0xf]
        %v1921 = vld [vmem:[%s7 + $0x1c] sm:$0xf]
        %v1922 = vld [vmem:[%s7 + $0x20] sm:$0xf]
        %v1923 = vld [vmem:[%s7 + $0x24] sm:$0xf]
        %v1924 = vld [vmem:[%s7 + $0x28] sm:$0xf]
        %v1925 = vld [vmem:[%s7 + $0x2c] sm:$0xf]
        %v1926 = vld [vmem:[%s7 + $0x30] sm:$0xf]
        %v1927 = vld [vmem:[%s7 + $0x34] sm:$0xf]
        %v1928 = vld [vmem:[%s7 + $0x38] sm:$0xf]
        %v1929 = vld [vmem:[%s7 + $0x3c] sm:$0xf]
        %v1930 = vld [vmem:[%s8] sm:$0x1]
        %v1932 = vlaneseq
        %v1933 = vshrl.u32 %v1932, 7
        %v1934 = vsub.s32 0, %v1933
        %v1935 = vrot.slane %v1930, %v1934
        %v1953 = vunpack.c.l.b16 %v1914
        %v1954 = vunpack.c.l.b16 %v1915
        %v1955 = vunpack.c.l.b16 %v1916
        %v1956 = vunpack.c.l.b16 %v1917
        %v1957 = vunpack.c.l.b16 %v1918
        %v1958 = vunpack.c.l.b16 %v1919
        %v1959 = vunpack.c.l.b16 %v1920
        %v1960 = vunpack.c.l.b16 %v1921
        %v1961 = vunpack.c.l.b16 %v1922
        %v1962 = vunpack.c.l.b16 %v1923
        %v1963 = vunpack.c.l.b16 %v1924
        %v1964 = vunpack.c.l.b16 %v1925
        %v1965 = vunpack.c.l.b16 %v1926
        %v1966 = vunpack.c.l.b16 %v1927
        %v1967 = vunpack.c.l.b16 %v1928
        %v1968 = vunpack.c.l.b16 %v1929
        %v1969 = vpack.c.b16 %v1954, %v1953
        %v1970 = vpack.c.b16 %v1956, %v1955
        %v1971 = vpack.c.b16 %v1958, %v1957
        %v1972 = vpack.c.b16 %v1960, %v1959
        %v1973 = vpack.c.b16 %v1962, %v1961
        %v1974 = vpack.c.b16 %v1964, %v1963
        %v1975 = vpack.c.b16 %v1966, %v1965
        %v1976 = vpack.c.b16 %v1968, %v1967
        %1985 = vmatprep.subr.bf16.mxu0 0
        %1986 = vmatpush1.bf16.msra.mxu0 %v1969
        %1987 = vmatprep.subr.bf16.mxu0 0
        %1988 = vmatpush1.bf16.msra.mxu0 %v1970
        %1989 = vmatprep.subr.bf16.mxu0 0
        %1990 = vmatpush1.bf16.msra.mxu0 %v1971
        %1991 = vmatprep.subr.bf16.mxu0 0
        %1992 = vmatpush1.bf16.msra.mxu0 %v1972
        %1993 = vmatprep.subr.bf16.mxu0 0
        %1994 = vmatpush1.bf16.msra.mxu0 %v1973
        %1995 = vmatprep.subr.bf16.mxu0 0
        %1996 = vmatpush1.bf16.msra.mxu0 %v1974
        %1997 = vmatprep.subr.bf16.mxu0 0
        %1998 = vmatpush1.bf16.msra.mxu0 %v1975
        %1999 = vmatprep.subr.bf16.mxu0 0
        %2000 = vmatpush1.bf16.msra.mxu0 %v1976
        %2001 = vmatprep.subr.bf16.mxu0 0
        %2002 = vmatpush1.bf16.msra.mxu0 0
        %2003 = vmatprep.subr.bf16.mxu0 0
        %2004 = vmatpush1.bf16.msra.mxu0 0
        %2005 = vmatprep.subr.bf16.mxu0 0
        %2006 = vmatpush1.bf16.msra.mxu0 0
        %2007 = vmatprep.subr.bf16.mxu0 0
        %2008 = vmatpush1.bf16.msra.mxu0 0
        %2009 = vmatprep.subr.bf16.mxu0 0
        %2010 = vmatpush1.bf16.msra.mxu0 0
        %2011 = vmatprep.subr.bf16.mxu0 0
        %2012 = vmatpush1.bf16.msra.mxu0 0
        %2013 = vmatprep.subr.bf16.mxu0 0
        %2014 = vmatpush1.bf16.msra.mxu0 0
        %2015 = vmatprep.subr.bf16.mxu0 0
        %2016 = vmatpush1.bf16.msra.mxu0 0
        %2017 = vmatprep.mubr.bf16.mxu0 0
        %2018 = vmatmul.mubr.bf16.gmra.mrb[0].mxu0 %v1910
        %v2019 = vpop.f32.mrb[0].mxu0
        %v2020 = vadd.f32 %v1935, %v2019
        %v2021 = vpop.f32.mrb[0].mxu0
        %v2022 = vpop.f32.mrb[0].mxu0
        %v2023 = vadd.f32 %v1935, %v2022
        %v2024 = vpop.f32.mrb[0].mxu0
        %2025 = vmatprep.mubr.bf16.mxu0 0
        %2026 = vmatmul.mubr.bf16.gmra.mrb[0].mxu0 %v1911
        %v2027 = vpop.f32.mrb[0].mxu0
        %v2028 = vadd.f32 %v1935, %v2027
        %v2029 = vpop.f32.mrb[0].mxu0
        %v2030 = vpop.f32.mrb[0].mxu0
        %v2031 = vadd.f32 %v1935, %v2030
        %v2032 = vpop.f32.mrb[0].mxu0
        %2033 = vmatprep.mubr.bf16.mxu0 0
        %2034 = vmatmul.mubr.bf16.gmra.mrb[0].mxu0 %v1912
        %v2035 = vpop.f32.mrb[0].mxu0
        %v2036 = vadd.f32 %v1935, %v2035
        %v2037 = vpop.f32.mrb[0].mxu0
        %v2038 = vpop.f32.mrb[0].mxu0
        %v2039 = vadd.f32 %v1935, %v2038
        %v2040 = vpop.f32.mrb[0].mxu0
        %2041 = vmatprep.mubr.bf16.mxu0 0
        %2042 = vmatmul.mubr.bf16.gmra.mrb[0].mxu0 %v1913
        %v2043 = vpop.f32.mrb[0].mxu0
        %v2044 = vadd.f32 %v1935, %v2043
        %v2045 = vpop.f32.mrb[0].mxu0
        %v2046 = vpop.f32.mrb[0].mxu0
        %v2047 = vadd.f32 %v1935, %v2046
        %v2048 = vpop.f32.mrb[0].mxu0
        %2049 = vdwg.mxu0
        %v2050 = vld [vmem:[%s452] sm:$0xf]
        %v2051 = vld [vmem:[%s452 + $0x4] sm:$0xf]
        %v2052 = vld [vmem:[%s452 + $0x8] sm:$0xf]
        %v2053 = vld [vmem:[%s452 + $0xc] sm:$0xf]
        %v2054 = vld [vmem:[%s452 + $0x10] sm:$0xf]
        %v2055 = vld [vmem:[%s452 + $0x14] sm:$0xf]
        %v2056 = vld [vmem:[%s452 + $0x18] sm:$0xf]
        %v2057 = vld [vmem:[%s452 + $0x1c] sm:$0xf]
        %v2058 = vunpack.c.l.bf16 %v2050
        %v2059 = vunpack.c.l.bf16 %v2051
        %v2060 = vunpack.c.l.bf16 %v2052
        %v2061 = vunpack.c.l.bf16 %v2053
        %v2062 = vunpack.c.l.bf16 %v2054
        %v2063 = vunpack.c.l.bf16 %v2055
        %v2064 = vunpack.c.l.bf16 %v2056
        %v2065 = vunpack.c.l.bf16 %v2057
        %v2066 = vadd.f32 %v2020, %v2058
        %v2067 = vadd.f32 %v2023, %v2059
        %v2068 = vadd.f32 %v2028, %v2060
        %v2069 = vadd.f32 %v2031, %v2061
        %v2070 = vadd.f32 %v2036, %v2062
        %v2071 = vadd.f32 %v2039, %v2063
        %v2072 = vadd.f32 %v2044, %v2064
        %v2073 = vadd.f32 %v2047, %v2065
        %v2074 = vmax.f32 %v2066, 0.0
        %v2075 = vmax.f32 %v2067, 0.0
        %v2076 = vmax.f32 %v2068, 0.0
        %v2077 = vmax.f32 %v2069, 0.0
        %v2078 = vmax.f32 %v2070, 0.0
        %v2079 = vmax.f32 %v2071, 0.0
        %v2080 = vmax.f32 %v2072, 0.0
        %v2081 = vmax.f32 %v2073, 0.0
        %2082 = vst [vmem:[%s442] sm:$0xff] %v2074
        %2083 = vst [vmem:[%s442 + $0x8] sm:$0xff] %v2075
        %2084 = vst [vmem:[%s442 + $0x10] sm:$0xff] %v2076
        %2085 = vst [vmem:[%s442 + $0x18] sm:$0xff] %v2077
        %2086 = vst [vmem:[%s442 + $0x20] sm:$0xff] %v2078
        %2087 = vst [vmem:[%s442 + $0x28] sm:$0xff] %v2079
        %2088 = vst [vmem:[%s442 + $0x30] sm:$0xff] %v2080
        %2089 = vst [vmem:[%s442 + $0x38] sm:$0xff] %v2081
        %s2090 = sand.u32 %s271, 1
        %s2091 = scalar_lea.sflag [#allocation4], %s2090
        %s2092 = sand.u32 %s271, 1
        %s2093 = smul.addr %s2092, 64
        %s2094 = scalar_lea.vmem [#allocation3], %s2093
        // Predicated region
        $region57: #{bottleneck_pallas.1} parent=55 // pred_check
          %p2095 = pneg %p281
        $region58: #{bottleneck_pallas.1} parent=55 // pred_check_branch
          %2097 = sbr.rel (%p2095) target = $region60
        $region59: #{bottleneck_pallas.1} parent=55 // pred_region
          %s2098 = smul.u32 4, %s28
          %s2100 = ssub.s32 1024, 1024
          %2101 = vsyncadd %s2091, %s2100
          %s2102 = smul.addr %s2098, 2
          %s2103 = smul.addr %s27, 32
          %s2104 = sadd.s32 %s2102, %s2103
          %s2105 = smul.addr %s2104, 128
          %s2106 = scalar_lea.hbm %s9, %s2105
          %s2107 = sshll.u32 %s2094, 4
          %s2108 = int_to_ptr.vmem [resolvable:$true] %s2107
          %2113 = dma.vmem_to_hbm [thread:$0]  %s2108, 1024, %s2106, %s2091, 128, 128, 8
        $region60: #{bottleneck_pallas.1} parent=55 // pred_fallthru
          _
      $region56: #{bottleneck_pallas.1} parent=5 // pred_fallthru
        _
      %p2114 = scmp.le.s32.totalorder 2, %s18
      // Predicated region
      $region61: #{bottleneck_pallas.1} parent=5 // pred_check
        %p2115 = pneg %p2114
      $region62: #{bottleneck_pallas.1} parent=5 // pred_check_branch
        %2117 = sbr.rel (%p2115) target = $region64
      $region63: #{bottleneck_pallas.1} parent=5 // pred_region
        %s2118 = ssub.s32 %s18, 2
        // Predicated region
        $region65: #{bottleneck_pallas.1} parent=63 // pred_check
          %p2119 = pneg %p287
        $region66: #{bottleneck_pallas.1} parent=63 // pred_check_branch
          %2121 = sbr.rel (%p2119) target = $region68
        $region67: #{bottleneck_pallas.1} parent=63 // pred_region
          %s2122 = sand.u32 %s272, 1
          %s2123 = scalar_lea.sflag [#allocation4], %s2122
          %s2124 = sand.u32 %s272, 1
          %s2125 = smul.addr %s2124, 64
          %s2126 = scalar_lea.vmem [#allocation3], %s2125
          %2127 = dma.done %s2123, 1024
        $region68: #{bottleneck_pallas.1} parent=63 // pred_fallthru
          _
      $region64: #{bottleneck_pallas.1} parent=5 // pred_fallthru
        _
    $region6: #{bottleneck_pallas.1} parent=1 // loop_footer
      %s22 = sadd.s32 1, %s18
    $region7: #{bottleneck_pallas.1} parent=1 // loop_footer_branch
      %17 = sbr.rel target = $region3
    $region8: #{bottleneck_pallas.1} parent=1 // loop_exit
      _
    %2128 = vsyncpa [#allocation4], 1
    %s2129 = scalar_lea.sflag [#allocation4], 1
    %2130 = vsyncpa %s2129, 1

</llo_original>
